<compile_context>
chip_gen: v7x
topology: tpu7x:2x2x1
jax: 0.10.0
libtpu: 0.0.40
codegen_flags: <defaults>
</compile_context>

<pallas_src>
import functools

import jax
import jax.numpy as jnp
from jax.experimental import pallas as pl
from jax.experimental.pallas import tpu as pltpu

SUBLANE = 8    # f32 sublane tile
LANE = 128     # lane tile


def lstm_classifier_kernel(x_ref, wih_ref, whh_ref, b_ref, wout_ref, bout_ref,
                           out_ref, xp_ref, *, T, Bp, H):
    """x_ref: (T*Bp, E) bf16; wih: (E,4H) bf16; whh: (H,4H) bf16; b: (1,4H) f32;
    wout: (H, Cpad) bf16; bout: (1, Cpad) f32; out: (Bp, Cpad) f32;
    xp_ref scratch: (T*Bp, 4H) f32."""

    # ---- 1) Hoisted input projection: one big MXU matmul, bias folded once,
    #         written to the 2-D scratch with a single full-tile store. --------
    xp_ref[...] = jnp.dot(x_ref[...], wih_ref[...],
                          preferred_element_type=jnp.float32) + b_ref[...]

    # ---- 2) Serial recurrence: only h @ W_hh remains on the critical path. ---
    # W_hh loaded once (loop-invariant), not re-issued per unrolled step.
    whh = whh_ref[...]

    h = jnp.zeros((Bp, H), jnp.float32)
    c = jnp.zeros((Bp, H), jnp.float32)
    for t in range(T):  # static full unroll; t*Bp offsets are sublane-tile aligned
        gates = xp_ref[pl.ds(t * Bp, Bp), :] + jnp.dot(
            h.astype(jnp.bfloat16), whh, preferred_element_type=jnp.float32)
        # H % 128 == 0  =>  each gate slice is lane-tile aligned (pure VPU/EUP).
        i_g = jax.nn.sigmoid(gates[:, 0 * H:1 * H])
        f_g = jax.nn.sigmoid(gates[:, 1 * H:2 * H])
        g_g = jnp.tanh(gates[:, 2 * H:3 * H])
        o_g = jax.nn.sigmoid(gates[:, 3 * H:4 * H])
        c = f_g * c + i_g * g_g
        h = o_g * jnp.tanh(c)

    # ---- 3) Classifier head, lane-dense (padded) unmasked store. -------------
    out_ref[...] = (jnp.dot(h.astype(jnp.bfloat16), wout_ref[...],
                            preferred_element_type=jnp.float32)
                    + bout_ref[...])


def prepare_kernel_params(params):
    """One-time weight prep (bf16 cast + class-dim padding), outside the
    per-call forward path so no pad/cast ops feed the kernel each call."""
    H = params["w_hh"].shape[0]
    C = params["w_out"].shape[1]
    C_pad = pl.cdiv(C, LANE) * LANE
    w_out_p = jnp.zeros((H, C_pad), jnp.bfloat16).at[:, :C].set(
        params["w_out"].astype(jnp.bfloat16))
    b_out_p = jnp.zeros((1, C_pad), jnp.float32).at[:, :C].set(params["b_out"])
    return {
        "embed": params["embed"],
        "w_ih_b": params["w_ih"].astype(jnp.bfloat16),
        "w_hh_b": params["w_hh"].astype(jnp.bfloat16),
        "b": params["b"],
        "w_out_p": w_out_p,
        "b_out_p": b_out_p,
    }


def lstm_classifier(emb_x, kparams, nclasses):
    """emb_x: (T, B, E) f32. Returns logits (B, nclasses) f32."""
    T, B, E = emb_x.shape
    H = kparams["w_hh_b"].shape[0]
    C_pad = kparams["w_out_p"].shape[1]
    assert kparams["w_hh_b"].shape == (H, 4 * H)
    assert H % LANE == 0, "hidden_size must be a multiple of 128 for lane-aligned gates"

    # Pad batch to a full f32 sublane tile: unmasked stores, tile-aligned slices.
    Bp = pl.cdiv(B, SUBLANE) * SUBLANE
    x = jnp.zeros((T, Bp, E), jnp.bfloat16).at[:, :B, :].set(
        emb_x.astype(jnp.bfloat16))
    x2d = x.reshape(T * Bp, E)

    kernel = functools.partial(lstm_classifier_kernel, T=T, Bp=Bp, H=H)

    out = pl.pallas_call(
        kernel,
        out_shape=jax.ShapeDtypeStruct((Bp, C_pad), jnp.float32),
        # No grid: everything (inputs, weights, output) is a whole-array VMEM
        # block (well under VMEM at these shapes); recurrence runs unrolled
        # inside one invocation.
        scratch_shapes=[pltpu.VMEM((T * Bp, 4 * H), jnp.float32)],  # X @ W_ih + b
    )(x2d, kparams["w_ih_b"], kparams["w_hh_b"], kparams["b"],
      kparams["w_out_p"], kparams["b_out_p"])

    return out[:B, :nclasses]


def model_forward(tokens, kparams, nclasses):
    """tokens: (T, B) int32. Embedding gather is glue; LSTM + Linear in Pallas."""
    emb_x = kparams["embed"][tokens]               # (T, B, E) gather — glue
    return lstm_classifier(emb_x, kparams, nclasses)


def reference_forward(tokens, params):
    """Pure-JAX reference of the same forward pass (PyTorch LSTM semantics),
    mirroring the kernel's bf16-operand / f32-accumulate matmul numerics."""
    emb = params["embed"][tokens].astype(jnp.bfloat16)
    H = params["w_hh"].shape[0]
    w_ih = params["w_ih"].astype(jnp.bfloat16)
    w_hh = params["w_hh"].astype(jnp.bfloat16)
    w_out = params["w_out"].astype(jnp.bfloat16)

    def step(carry, x_t):
        h, c = carry
        gates = (jnp.dot(x_t, w_ih, preferred_element_type=jnp.float32)
                 + jnp.dot(h.astype(jnp.bfloat16), w_hh,
                           preferred_element_type=jnp.float32)
                 + params["b"][0])
        i_g = jax.nn.sigmoid(gates[:, 0 * H:1 * H])
        f_g = jax.nn.sigmoid(gates[:, 1 * H:2 * H])
        g_g = jnp.tanh(gates[:, 2 * H:3 * H])
        o_g = jax.nn.sigmoid(gates[:, 3 * H:4 * H])
        c = f_g * c + i_g * g_g
        h = o_g * jnp.tanh(c)
        return (h, c), None

    B = tokens.shape[1]
    h0 = jnp.zeros((B, H), jnp.float32)
    (h, _), _ = jax.lax.scan(step, (h0, h0), emb)
    return (jnp.dot(h.astype(jnp.bfloat16), w_out,
                    preferred_element_type=jnp.float32)
            + params["b_out"][0])


if __name__ == "__main__":
    # Small shapes consistent with the module (hidden multiple of 128).
    VOCAB, EMB, HIDDEN, NCLASSES = 64, 64, 128, 5
    T, B = 8, 2

    key = jax.random.PRNGKey(0)
    ks = jax.random.split(key, 7)
    params = {
        "embed": jax.random.normal(ks[0], (VOCAB, EMB), jnp.float32) * 0.1,
        # PyTorch stores W_ih as (4H, E); we keep the transposed (E, 4H) layout.
        "w_ih": jax.random.normal(ks[1], (EMB, 4 * HIDDEN), jnp.float32) * 0.1,
        "w_hh": jax.random.normal(ks[2], (HIDDEN, 4 * HIDDEN), jnp.float32) * 0.1,
        # combined bias b_ih + b_hh, kept 2-D for TPU layout.
        "b": jax.random.normal(ks[3], (1, 4 * HIDDEN), jnp.float32) * 0.1,
        "w_out": jax.random.normal(ks[4], (HIDDEN, NCLASSES), jnp.float32) * 0.1,
        "b_out": jax.random.normal(ks[5], (1, NCLASSES), jnp.float32) * 0.1,
    }
    tokens = jax.random.randint(ks[6], (T, B), 0, VOCAB, dtype=jnp.int32)

    # TODO(synk): dropout (train-time only), bidirectional / attention / max-pool
    # branches are disabled by default args and are not implemented here.

    kparams = prepare_kernel_params(params)   # one-time pad/cast, not per call

    logits = jax.block_until_ready(model_forward(tokens, kparams, NCLASSES))
    ref = jax.block_until_ready(reference_forward(tokens, params))

    assert logits.shape == (B, NCLASSES), logits.shape
    assert jnp.allclose(logits, ref, atol=1e-3, rtol=1e-3), (logits, ref)
    print("KERNEL_OK")
</pallas_src>

<mosaic_0001>
module attributes {stable_mosaic.version = 11 : i64} {
  func.func @lstm_classifier_kernel(%arg0: memref<64x64xbf16, #tpu.memory_space<vmem>>, %arg1: memref<64x512xbf16, #tpu.memory_space<vmem>>, %arg2: memref<128x512xbf16, #tpu.memory_space<vmem>>, %arg3: memref<1x512xf32, #tpu.memory_space<vmem>>, %arg4: memref<128x128xbf16, #tpu.memory_space<vmem>>, %arg5: memref<1x128xf32, #tpu.memory_space<vmem>>, %arg6: memref<8x128xf32, #tpu.memory_space<vmem>>, %arg7: memref<64x512xf32, #tpu.memory_space<vmem>>) attributes {dimension_semantics = [], scalar_prefetch = 0 : i64, scratch_operands = 1 : i64, tpu.core_type = #tpu.core_type<tc>} {
    %c0 = arith.constant 0 : index
    %c0_0 = arith.constant 0 : index
    %0 = vector.load %arg0[%c0, %c0_0] : memref<64x64xbf16, #tpu.memory_space<vmem>>, vector<64x64xbf16>
    %c0_1 = arith.constant 0 : index
    %c0_2 = arith.constant 0 : index
    %1 = vector.load %arg1[%c0_1, %c0_2] : memref<64x512xbf16, #tpu.memory_space<vmem>>, vector<64x512xbf16>
    %cst = arith.constant dense<0.000000e+00> : vector<64x512xf32>
    %2 = tpu.matmul %0, %1, %cst {dimension_numbers = #tpu.dot_dimension_numbers<[1], [0], [0], [1], [0, 0, 1, 1], [], []>} : vector<64x64xbf16>, vector<64x512xbf16>, vector<64x512xf32> -> vector<64x512xf32>
    %c0_3 = arith.constant 0 : index
    %c0_4 = arith.constant 0 : index
    %3 = vector.load %arg3[%c0_3, %c0_4] : memref<1x512xf32, #tpu.memory_space<vmem>>, vector<1x512xf32>
    %4 = vector.broadcast %3 : vector<1x512xf32> to vector<64x512xf32>
    %5 = arith.addf %2, %4 : vector<64x512xf32>
    %c0_5 = arith.constant 0 : index
    %c0_6 = arith.constant 0 : index
    %6 = vector.load %arg7[%c0_5, %c0_6] : memref<64x512xf32, #tpu.memory_space<vmem>>, vector<64x512xf32>
    tpu.vector_store %arg7[%c0_5, %c0_6], %5 {strides = array<i32>} : memref<64x512xf32, #tpu.memory_space<vmem>>, vector<64x512xf32>,
    %c0_7 = arith.constant 0 : index
    %c0_8 = arith.constant 0 : index
    %7 = vector.load %arg2[%c0_7, %c0_8] : memref<128x512xbf16, #tpu.memory_space<vmem>>, vector<128x512xbf16>
    %cst_9 = arith.constant 0.000000e+00 : f32
    %8 = vector.broadcast %cst_9 : f32 to vector<8x128xf32>
    %cst_10 = arith.constant 0.000000e+00 : f32
    %9 = vector.broadcast %cst_10 : f32 to vector<8x128xf32>
    %c0_11 = arith.constant 0 : index
    %c0_12 = arith.constant 0 : index
    %10 = vector.load %arg7[%c0_11, %c0_12] : memref<64x512xf32, #tpu.memory_space<vmem>>, vector<8x512xf32>
    %11 = arith.truncf %8 : vector<8x128xf32> to vector<8x128xbf16>
    %cst_13 = arith.constant dense<0.000000e+00> : vector<8x512xf32>
    %12 = tpu.matmul %11, %7, %cst_13 {dimension_numbers = #tpu.dot_dimension_numbers<[1], [0], [0], [1], [0, 0, 1, 1], [], []>} : vector<8x128xbf16>, vector<128x512xbf16>, vector<8x512xf32> -> vector<8x512xf32>
    %13 = arith.addf %10, %12 : vector<8x512xf32>
    %14 = vector.extract_strided_slice %13 {offsets = [0, 0], sizes = [8, 128], strides = [1, 1]} : vector<8x512xf32> to vector<8x128xf32>
    %15 = arith.negf %14 : vector<8x128xf32>
    %16 = math.exp %15 : vector<8x128xf32>
    %cst_14 = arith.constant 1.000000e+00 : f32
    %17 = vector.broadcast %cst_14 : f32 to vector<8x128xf32>
    %18 = arith.addf %17, %16 : vector<8x128xf32>
    %19 = arith.divf %17, %18 : vector<8x128xf32>
    %20 = vector.extract_strided_slice %13 {offsets = [0, 128], sizes = [8, 128], strides = [1, 1]} : vector<8x512xf32> to vector<8x128xf32>
    %21 = arith.negf %20 : vector<8x128xf32>
    %22 = math.exp %21 : vector<8x128xf32>
    %cst_15 = arith.constant 1.000000e+00 : f32
    %23 = vector.broadcast %cst_15 : f32 to vector<8x128xf32>
    %24 = arith.addf %23, %22 : vector<8x128xf32>
    %25 = arith.divf %23, %24 : vector<8x128xf32>
    %26 = vector.extract_strided_slice %13 {offsets = [0, 256], sizes = [8, 128], strides = [1, 1]} : vector<8x512xf32> to vector<8x128xf32>
    %27 = math.tanh %26 : vector<8x128xf32>
    %28 = vector.extract_strided_slice %13 {offsets = [0, 384], sizes = [8, 128], strides = [1, 1]} : vector<8x512xf32> to vector<8x128xf32>
    %29 = arith.negf %28 : vector<8x128xf32>
    %30 = math.exp %29 : vector<8x128xf32>
    %cst_16 = arith.constant 1.000000e+00 : f32
    %31 = vector.broadcast %cst_16 : f32 to vector<8x128xf32>
    %32 = arith.addf %31, %30 : vector<8x128xf32>
    %33 = arith.divf %31, %32 : vector<8x128xf32>
    %34 = arith.mulf %25, %9 : vector<8x128xf32>
    %35 = arith.mulf %19, %27 : vector<8x128xf32>
    %36 = arith.addf %34, %35 : vector<8x128xf32>
    %37 = math.tanh %36 : vector<8x128xf32>
    %38 = arith.mulf %33, %37 : vector<8x128xf32>
    %c8 = arith.constant 8 : index
    %c0_17 = arith.constant 0 : index
    %39 = vector.load %arg7[%c8, %c0_17] : memref<64x512xf32, #tpu.memory_space<vmem>>, vector<8x512xf32>
    %40 = arith.truncf %38 : vector<8x128xf32> to vector<8x128xbf16>
    %cst_18 = arith.constant dense<0.000000e+00> : vector<8x512xf32>
    %41 = tpu.matmul %40, %7, %cst_18 {dimension_numbers = #tpu.dot_dimension_numbers<[1], [0], [0], [1], [0, 0, 1, 1], [], []>} : vector<8x128xbf16>, vector<128x512xbf16>, vector<8x512xf32> -> vector<8x512xf32>
    %42 = arith.addf %39, %41 : vector<8x512xf32>
    %43 = vector.extract_strided_slice %42 {offsets = [0, 0], sizes = [8, 128], strides = [1, 1]} : vector<8x512xf32> to vector<8x128xf32>
    %44 = arith.negf %43 : vector<8x128xf32>
    %45 = math.exp %44 : vector<8x128xf32>
    %cst_19 = arith.constant 1.000000e+00 : f32
    %46 = vector.broadcast %cst_19 : f32 to vector<8x128xf32>
    %47 = arith.addf %46, %45 : vector<8x128xf32>
    %48 = arith.divf %46, %47 : vector<8x128xf32>
    %49 = vector.extract_strided_slice %42 {offsets = [0, 128], sizes = [8, 128], strides = [1, 1]} : vector<8x512xf32> to vector<8x128xf32>
    %50 = arith.negf %49 : vector<8x128xf32>
    %51 = math.exp %50 : vector<8x128xf32>
    %cst_20 = arith.constant 1.000000e+00 : f32
    %52 = vector.broadcast %cst_20 : f32 to vector<8x128xf32>
    %53 = arith.addf %52, %51 : vector<8x128xf32>
    %54 = arith.divf %52, %53 : vector<8x128xf32>
    %55 = vector.extract_strided_slice %42 {offsets = [0, 256], sizes = [8, 128], strides = [1, 1]} : vector<8x512xf32> to vector<8x128xf32>
    %56 = math.tanh %55 : vector<8x128xf32>
    %57 = vector.extract_strided_slice %42 {offsets = [0, 384], sizes = [8, 128], strides = [1, 1]} : vector<8x512xf32> to vector<8x128xf32>
    %58 = arith.negf %57 : vector<8x128xf32>
    %59 = math.exp %58 : vector<8x128xf32>
    %cst_21 = arith.constant 1.000000e+00 : f32
    %60 = vector.broadcast %cst_21 : f32 to vector<8x128xf32>
    %61 = arith.addf %60, %59 : vector<8x128xf32>
    %62 = arith.divf %60, %61 : vector<8x128xf32>
    %63 = arith.mulf %54, %36 : vector<8x128xf32>
    %64 = arith.mulf %48, %56 : vector<8x128xf32>
    %65 = arith.addf %63, %64 : vector<8x128xf32>
    %66 = math.tanh %65 : vector<8x128xf32>
    %67 = arith.mulf %62, %66 : vector<8x128xf32>
    %c16 = arith.constant 16 : index
    %c0_22 = arith.constant 0 : index
    %68 = vector.load %arg7[%c16, %c0_22] : memref<64x512xf32, #tpu.memory_space<vmem>>, vector<8x512xf32>
    %69 = arith.truncf %67 : vector<8x128xf32> to vector<8x128xbf16>
    %cst_23 = arith.constant dense<0.000000e+00> : vector<8x512xf32>
    %70 = tpu.matmul %69, %7, %cst_23 {dimension_numbers = #tpu.dot_dimension_numbers<[1], [0], [0], [1], [0, 0, 1, 1], [], []>} : vector<8x128xbf16>, vector<128x512xbf16>, vector<8x512xf32> -> vector<8x512xf32>
    %71 = arith.addf %68, %70 : vector<8x512xf32>
    %72 = vector.extract_strided_slice %71 {offsets = [0, 0], sizes = [8, 128], strides = [1, 1]} : vector<8x512xf32> to vector<8x128xf32>
    %73 = arith.negf %72 : vector<8x128xf32>
    %74 = math.exp %73 : vector<8x128xf32>
    %cst_24 = arith.constant 1.000000e+00 : f32
    %75 = vector.broadcast %cst_24 : f32 to vector<8x128xf32>
    %76 = arith.addf %75, %74 : vector<8x128xf32>
    %77 = arith.divf %75, %76 : vector<8x128xf32>
    %78 = vector.extract_strided_slice %71 {offsets = [0, 128], sizes = [8, 128], strides = [1, 1]} : vector<8x512xf32> to vector<8x128xf32>
    %79 = arith.negf %78 : vector<8x128xf32>
    %80 = math.exp %79 : vector<8x128xf32>
    %cst_25 = arith.constant 1.000000e+00 : f32
    %81 = vector.broadcast %cst_25 : f32 to vector<8x128xf32>
    %82 = arith.addf %81, %80 : vector<8x128xf32>
    %83 = arith.divf %81, %82 : vector<8x128xf32>
    %84 = vector.extract_strided_slice %71 {offsets = [0, 256], sizes = [8, 128], strides = [1, 1]} : vector<8x512xf32> to vector<8x128xf32>
    %85 = math.tanh %84 : vector<8x128xf32>
    %86 = vector.extract_strided_slice %71 {offsets = [0, 384], sizes = [8, 128], strides = [1, 1]} : vector<8x512xf32> to vector<8x128xf32>
    %87 = arith.negf %86 : vector<8x128xf32>
    %88 = math.exp %87 : vector<8x128xf32>
    %cst_26 = arith.constant 1.000000e+00 : f32
    %89 = vector.broadcast %cst_26 : f32 to vector<8x128xf32>
    %90 = arith.addf %89, %88 : vector<8x128xf32>
    %91 = arith.divf %89, %90 : vector<8x128xf32>
    %92 = arith.mulf %83, %65 : vector<8x128xf32>
    %93 = arith.mulf %77, %85 : vector<8x128xf32>
    %94 = arith.addf %92, %93 : vector<8x128xf32>
    %95 = math.tanh %94 : vector<8x128xf32>
    %96 = arith.mulf %91, %95 : vector<8x128xf32>
    %c24 = arith.constant 24 : index
    %c0_27 = arith.constant 0 : index
    %97 = vector.load %arg7[%c24, %c0_27] : memref<64x512xf32, #tpu.memory_space<vmem>>, vector<8x512xf32>
    %98 = arith.truncf %96 : vector<8x128xf32> to vector<8x128xbf16>
    %cst_28 = arith.constant dense<0.000000e+00> : vector<8x512xf32>
    %99 = tpu.matmul %98, %7, %cst_28 {dimension_numbers = #tpu.dot_dimension_numbers<[1], [0], [0], [1], [0, 0, 1, 1], [], []>} : vector<8x128xbf16>, vector<128x512xbf16>, vector<8x512xf32> -> vector<8x512xf32>
    %100 = arith.addf %97, %99 : vector<8x512xf32>
    %101 = vector.extract_strided_slice %100 {offsets = [0, 0], sizes = [8, 128], strides = [1, 1]} : vector<8x512xf32> to vector<8x128xf32>
    %102 = arith.negf %101 : vector<8x128xf32>
    %103 = math.exp %102 : vector<8x128xf32>
    %cst_29 = arith.constant 1.000000e+00 : f32
    %104 = vector.broadcast %cst_29 : f32 to vector<8x128xf32>
    %105 = arith.addf %104, %103 : vector<8x128xf32>
    %106 = arith.divf %104, %105 : vector<8x128xf32>
    %107 = vector.extract_strided_slice %100 {offsets = [0, 128], sizes = [8, 128], strides = [1, 1]} : vector<8x512xf32> to vector<8x128xf32>
    %108 = arith.negf %107 : vector<8x128xf32>
    %109 = math.exp %108 : vector<8x128xf32>
    %cst_30 = arith.constant 1.000000e+00 : f32
    %110 = vector.broadcast %cst_30 : f32 to vector<8x128xf32>
    %111 = arith.addf %110, %109 : vector<8x128xf32>
    %112 = arith.divf %110, %111 : vector<8x128xf32>
    %113 = vector.extract_strided_slice %100 {offsets = [0, 256], sizes = [8, 128], strides = [1, 1]} : vector<8x512xf32> to vector<8x128xf32>
    %114 = math.tanh %113 : vector<8x128xf32>
    %115 = vector.extract_strided_slice %100 {offsets = [0, 384], sizes = [8, 128], strides = [1, 1]} : vector<8x512xf32> to vector<8x128xf32>
    %116 = arith.negf %115 : vector<8x128xf32>
    %117 = math.exp %116 : vector<8x128xf32>
    %cst_31 = arith.constant 1.000000e+00 : f32
    %118 = vector.broadcast %cst_31 : f32 to vector<8x128xf32>
    %119 = arith.addf %118, %117 : vector<8x128xf32>
    %120 = arith.divf %118, %119 : vector<8x128xf32>
    %121 = arith.mulf %112, %94 : vector<8x128xf32>
    %122 = arith.mulf %106, %114 : vector<8x128xf32>
    %123 = arith.addf %121, %122 : vector<8x128xf32>
    %124 = math.tanh %123 : vector<8x128xf32>
    %125 = arith.mulf %120, %124 : vector<8x128xf32>
    %c32 = arith.constant 32 : index
    %c0_32 = arith.constant 0 : index
    %126 = vector.load %arg7[%c32, %c0_32] : memref<64x512xf32, #tpu.memory_space<vmem>>, vector<8x512xf32>
    %127 = arith.truncf %125 : vector<8x128xf32> to vector<8x128xbf16>
    %cst_33 = arith.constant dense<0.000000e+00> : vector<8x512xf32>
    %128 = tpu.matmul %127, %7, %cst_33 {dimension_numbers = #tpu.dot_dimension_numbers<[1], [0], [0], [1], [0, 0, 1, 1], [], []>} : vector<8x128xbf16>, vector<128x512xbf16>, vector<8x512xf32> -> vector<8x512xf32>
    %129 = arith.addf %126, %128 : vector<8x512xf32>
    %130 = vector.extract_strided_slice %129 {offsets = [0, 0], sizes = [8, 128], strides = [1, 1]} : vector<8x512xf32> to vector<8x128xf32>
    %131 = arith.negf %130 : vector<8x128xf32>
    %132 = math.exp %131 : vector<8x128xf32>
    %cst_34 = arith.constant 1.000000e+00 : f32
    %133 = vector.broadcast %cst_34 : f32 to vector<8x128xf32>
    %134 = arith.addf %133, %132 : vector<8x128xf32>
    %135 = arith.divf %133, %134 : vector<8x128xf32>
    %136 = vector.extract_strided_slice %129 {offsets = [0, 128], sizes = [8, 128], strides = [1, 1]} : vector<8x512xf32> to vector<8x128xf32>
    %137 = arith.negf %136 : vector<8x128xf32>
    %138 = math.exp %137 : vector<8x128xf32>
    %cst_35 = arith.constant 1.000000e+00 : f32
    %139 = vector.broadcast %cst_35 : f32 to vector<8x128xf32>
    %140 = arith.addf %139, %138 : vector<8x128xf32>
    %141 = arith.divf %139, %140 : vector<8x128xf32>
    %142 = vector.extract_strided_slice %129 {offsets = [0, 256], sizes = [8, 128], strides = [1, 1]} : vector<8x512xf32> to vector<8x128xf32>
    %143 = math.tanh %142 : vector<8x128xf32>
    %144 = vector.extract_strided_slice %129 {offsets = [0, 384], sizes = [8, 128], strides = [1, 1]} : vector<8x512xf32> to vector<8x128xf32>
    %145 = arith.negf %144 : vector<8x128xf32>
    %146 = math.exp %145 : vector<8x128xf32>
    %cst_36 = arith.constant 1.000000e+00 : f32
    %147 = vector.broadcast %cst_36 : f32 to vector<8x128xf32>
    %148 = arith.addf %147, %146 : vector<8x128xf32>
    %149 = arith.divf %147, %148 : vector<8x128xf32>
    %150 = arith.mulf %141, %123 : vector<8x128xf32>
    %151 = arith.mulf %135, %143 : vector<8x128xf32>
    %152 = arith.addf %150, %151 : vector<8x128xf32>
    %153 = math.tanh %152 : vector<8x128xf32>
    %154 = arith.mulf %149, %153 : vector<8x128xf32>
    %c40 = arith.constant 40 : index
    %c0_37 = arith.constant 0 : index
    %155 = vector.load %arg7[%c40, %c0_37] : memref<64x512xf32, #tpu.memory_space<vmem>>, vector<8x512xf32>
    %156 = arith.truncf %154 : vector<8x128xf32> to vector<8x128xbf16>
    %cst_38 = arith.constant dense<0.000000e+00> : vector<8x512xf32>
    %157 = tpu.matmul %156, %7, %cst_38 {dimension_numbers = #tpu.dot_dimension_numbers<[1], [0], [0], [1], [0, 0, 1, 1], [], []>} : vector<8x128xbf16>, vector<128x512xbf16>, vector<8x512xf32> -> vector<8x512xf32>
    %158 = arith.addf %155, %157 : vector<8x512xf32>
    %159 = vector.extract_strided_slice %158 {offsets = [0, 0], sizes = [8, 128], strides = [1, 1]} : vector<8x512xf32> to vector<8x128xf32>
    %160 = arith.negf %159 : vector<8x128xf32>
    %161 = math.exp %160 : vector<8x128xf32>
    %cst_39 = arith.constant 1.000000e+00 : f32
    %162 = vector.broadcast %cst_39 : f32 to vector<8x128xf32>
    %163 = arith.addf %162, %161 : vector<8x128xf32>
    %164 = arith.divf %162, %163 : vector<8x128xf32>
    %165 = vector.extract_strided_slice %158 {offsets = [0, 128], sizes = [8, 128], strides = [1, 1]} : vector<8x512xf32> to vector<8x128xf32>
    %166 = arith.negf %165 : vector<8x128xf32>
    %167 = math.exp %166 : vector<8x128xf32>
    %cst_40 = arith.constant 1.000000e+00 : f32
    %168 = vector.broadcast %cst_40 : f32 to vector<8x128xf32>
    %169 = arith.addf %168, %167 : vector<8x128xf32>
    %170 = arith.divf %168, %169 : vector<8x128xf32>
    %171 = vector.extract_strided_slice %158 {offsets = [0, 256], sizes = [8, 128], strides = [1, 1]} : vector<8x512xf32> to vector<8x128xf32>
    %172 = math.tanh %171 : vector<8x128xf32>
    %173 = vector.extract_strided_slice %158 {offsets = [0, 384], sizes = [8, 128], strides = [1, 1]} : vector<8x512xf32> to vector<8x128xf32>
    %174 = arith.negf %173 : vector<8x128xf32>
    %175 = math.exp %174 : vector<8x128xf32>
    %cst_41 = arith.constant 1.000000e+00 : f32
    %176 = vector.broadcast %cst_41 : f32 to vector<8x128xf32>
    %177 = arith.addf %176, %175 : vector<8x128xf32>
    %178 = arith.divf %176, %177 : vector<8x128xf32>
    %179 = arith.mulf %170, %152 : vector<8x128xf32>
    %180 = arith.mulf %164, %172 : vector<8x128xf32>
    %181 = arith.addf %179, %180 : vector<8x128xf32>
    %182 = math.tanh %181 : vector<8x128xf32>
    %183 = arith.mulf %178, %182 : vector<8x128xf32>
    %c48 = arith.constant 48 : index
    %c0_42 = arith.constant 0 : index
    %184 = vector.load %arg7[%c48, %c0_42] : memref<64x512xf32, #tpu.memory_space<vmem>>, vector<8x512xf32>
    %185 = arith.truncf %183 : vector<8x128xf32> to vector<8x128xbf16>
    %cst_43 = arith.constant dense<0.000000e+00> : vector<8x512xf32>
    %186 = tpu.matmul %185, %7, %cst_43 {dimension_numbers = #tpu.dot_dimension_numbers<[1], [0], [0], [1], [0, 0, 1, 1], [], []>} : vector<8x128xbf16>, vector<128x512xbf16>, vector<8x512xf32> -> vector<8x512xf32>
    %187 = arith.addf %184, %186 : vector<8x512xf32>
    %188 = vector.extract_strided_slice %187 {offsets = [0, 0], sizes = [8, 128], strides = [1, 1]} : vector<8x512xf32> to vector<8x128xf32>
    %189 = arith.negf %188 : vector<8x128xf32>
    %190 = math.exp %189 : vector<8x128xf32>
    %cst_44 = arith.constant 1.000000e+00 : f32
    %191 = vector.broadcast %cst_44 : f32 to vector<8x128xf32>
    %192 = arith.addf %191, %190 : vector<8x128xf32>
    %193 = arith.divf %191, %192 : vector<8x128xf32>
    %194 = vector.extract_strided_slice %187 {offsets = [0, 128], sizes = [8, 128], strides = [1, 1]} : vector<8x512xf32> to vector<8x128xf32>
    %195 = arith.negf %194 : vector<8x128xf32>
    %196 = math.exp %195 : vector<8x128xf32>
    %cst_45 = arith.constant 1.000000e+00 : f32
    %197 = vector.broadcast %cst_45 : f32 to vector<8x128xf32>
    %198 = arith.addf %197, %196 : vector<8x128xf32>
    %199 = arith.divf %197, %198 : vector<8x128xf32>
    %200 = vector.extract_strided_slice %187 {offsets = [0, 256], sizes = [8, 128], strides = [1, 1]} : vector<8x512xf32> to vector<8x128xf32>
    %201 = math.tanh %200 : vector<8x128xf32>
    %202 = vector.extract_strided_slice %187 {offsets = [0, 384], sizes = [8, 128], strides = [1, 1]} : vector<8x512xf32> to vector<8x128xf32>
    %203 = arith.negf %202 : vector<8x128xf32>
    %204 = math.exp %203 : vector<8x128xf32>
    %cst_46 = arith.constant 1.000000e+00 : f32
    %205 = vector.broadcast %cst_46 : f32 to vector<8x128xf32>
    %206 = arith.addf %205, %204 : vector<8x128xf32>
    %207 = arith.divf %205, %206 : vector<8x128xf32>
    %208 = arith.mulf %199, %181 : vector<8x128xf32>
    %209 = arith.mulf %193, %201 : vector<8x128xf32>
    %210 = arith.addf %208, %209 : vector<8x128xf32>
    %211 = math.tanh %210 : vector<8x128xf32>
    %212 = arith.mulf %207, %211 : vector<8x128xf32>
    %c56 = arith.constant 56 : index
    %c0_47 = arith.constant 0 : index
    %213 = vector.load %arg7[%c56, %c0_47] : memref<64x512xf32, #tpu.memory_space<vmem>>, vector<8x512xf32>
    %214 = arith.truncf %212 : vector<8x128xf32> to vector<8x128xbf16>
    %cst_48 = arith.constant dense<0.000000e+00> : vector<8x512xf32>
    %215 = tpu.matmul %214, %7, %cst_48 {dimension_numbers = #tpu.dot_dimension_numbers<[1], [0], [0], [1], [0, 0, 1, 1], [], []>} : vector<8x128xbf16>, vector<128x512xbf16>, vector<8x512xf32> -> vector<8x512xf32>
    %216 = arith.addf %213, %215 : vector<8x512xf32>
    %217 = vector.extract_strided_slice %216 {offsets = [0, 0], sizes = [8, 128], strides = [1, 1]} : vector<8x512xf32> to vector<8x128xf32>
    %218 = arith.negf %217 : vector<8x128xf32>
    %219 = math.exp %218 : vector<8x128xf32>
    %cst_49 = arith.constant 1.000000e+00 : f32
    %220 = vector.broadcast %cst_49 : f32 to vector<8x128xf32>
    %221 = arith.addf %220, %219 : vector<8x128xf32>
    %222 = arith.divf %220, %221 : vector<8x128xf32>
    %223 = vector.extract_strided_slice %216 {offsets = [0, 128], sizes = [8, 128], strides = [1, 1]} : vector<8x512xf32> to vector<8x128xf32>
    %224 = arith.negf %223 : vector<8x128xf32>
    %225 = math.exp %224 : vector<8x128xf32>
    %cst_50 = arith.constant 1.000000e+00 : f32
    %226 = vector.broadcast %cst_50 : f32 to vector<8x128xf32>
    %227 = arith.addf %226, %225 : vector<8x128xf32>
    %228 = arith.divf %226, %227 : vector<8x128xf32>
    %229 = vector.extract_strided_slice %216 {offsets = [0, 256], sizes = [8, 128], strides = [1, 1]} : vector<8x512xf32> to vector<8x128xf32>
    %230 = math.tanh %229 : vector<8x128xf32>
    %231 = vector.extract_strided_slice %216 {offsets = [0, 384], sizes = [8, 128], strides = [1, 1]} : vector<8x512xf32> to vector<8x128xf32>
    %232 = arith.negf %231 : vector<8x128xf32>
    %233 = math.exp %232 : vector<8x128xf32>
    %cst_51 = arith.constant 1.000000e+00 : f32
    %234 = vector.broadcast %cst_51 : f32 to vector<8x128xf32>
    %235 = arith.addf %234, %233 : vector<8x128xf32>
    %236 = arith.divf %234, %235 : vector<8x128xf32>
    %237 = arith.mulf %228, %210 : vector<8x128xf32>
    %238 = arith.mulf %222, %230 : vector<8x128xf32>
    %239 = arith.addf %237, %238 : vector<8x128xf32>
    %240 = math.tanh %239 : vector<8x128xf32>
    %241 = arith.mulf %236, %240 : vector<8x128xf32>
    %242 = arith.truncf %241 : vector<8x128xf32> to vector<8x128xbf16>
    %c0_52 = arith.constant 0 : index
    %c0_53 = arith.constant 0 : index
    %243 = vector.load %arg4[%c0_52, %c0_53] : memref<128x128xbf16, #tpu.memory_space<vmem>>, vector<128x128xbf16>
    %cst_54 = arith.constant dense<0.000000e+00> : vector<8x128xf32>
    %244 = tpu.matmul %242, %243, %cst_54 {dimension_numbers = #tpu.dot_dimension_numbers<[1], [0], [0], [1], [0, 0, 1, 1], [], []>} : vector<8x128xbf16>, vector<128x128xbf16>, vector<8x128xf32> -> vector<8x128xf32>
    %c0_55 = arith.constant 0 : index
    %c0_56 = arith.constant 0 : index
    %245 = vector.load %arg5[%c0_55, %c0_56] : memref<1x128xf32, #tpu.memory_space<vmem>>, vector<1x128xf32>
    %246 = vector.broadcast %245 : vector<1x128xf32> to vector<8x128xf32>
    %247 = arith.addf %244, %246 : vector<8x128xf32>
    %c0_57 = arith.constant 0 : index
    %c0_58 = arith.constant 0 : index
    %248 = vector.load %arg6[%c0_57, %c0_58] : memref<8x128xf32, #tpu.memory_space<vmem>>, vector<8x128xf32>
    tpu.vector_store %arg6[%c0_57, %c0_58], %247 {strides = array<i32>} : memref<8x128xf32, #tpu.memory_space<vmem>>, vector<8x128xf32>,
    return
  }
}

</mosaic_0001>

<llo_original>
// kernel: tpu_custom_call.1
$region0: #{tpu_custom_call.1}
  #allocation0 [shape = 'u32[]', space=smem, size = 0x4, offset = 0x4, fixed_abs, tag = 'smem constant byte address 0x4 - core index']
  #allocation1 [shape = 'u32[144,128]{1,0:T(1,128)}', space=vmem, size = 0x12000, scoped, tag = 'internal scratch']
  #allocation2 [shape = 'f32[64,512]{1,0:T(8,128)}', space=vmem, size = 0x20000, scoped, tag = 'scratch operand']
  %s0 = inlined_call_operand.hbm [shape: bf16[64,64], index: 0, kind: input, shape index: {}]
  %s1 = inlined_call_operand.hbm [shape: bf16[64,512], index: 1, kind: input, shape index: {}]
  %s2 = inlined_call_operand.hbm [shape: bf16[128,512], index: 2, kind: input, shape index: {}]
  %s3 = inlined_call_operand.vmem [shape: f32[1,512], index: 3, kind: input, shape index: {}]
  %s4 = inlined_call_operand.hbm [shape: bf16[128,128], index: 4, kind: input, shape index: {}]
  %s5 = inlined_call_operand.vmem [shape: f32[1,128], index: 5, kind: input, shape index: {}]
  %s6 = inlined_call_operand.hbm [shape: f32[8,128], index: 6, kind: output, shape index: {}]
  %s7 = sld [smem:[#allocation0]]
  $region50: #{tpu_custom_call.1} parent=0
    _
  %s9 = ssub.s32 1, %s7
  %s10 = scalar_select 0, %s9, %s7
  $region1: #{tpu_custom_call.1} parent=0
    #allocation3 [shape = 'u8[16384]{0}', space=vmem, size = 0x4000, scoped, tag = 'input window, operand 0, single buffered']
    #allocation4 [shape = 's32[1]{0}', space=sflag, size = 0x4, scoped, tag = 'scoped memory for tpu_custom_call.1']
    #allocation5 [shape = 's32[1]{0}', space=sflag, size = 0x4, scoped, tag = 'scoped memory for tpu_custom_call.1']
    #allocation6 [shape = 'u8[65536]{0}', space=vmem, size = 0x10000, scoped, tag = 'input window, operand 1, single buffered']
    #allocation7 [shape = 's32[1]{0}', space=sflag, size = 0x4, scoped, tag = 'scoped memory for tpu_custom_call.1']
    #allocation8 [shape = 'u8[131072]{0}', space=vmem, size = 0x20000, scoped, tag = 'input window, operand 2, single buffered']
    #allocation9 [shape = 'u8[32768]{0}', space=vmem, size = 0x8000, scoped, tag = 'input window, operand 4, single buffered']
    #allocation10 [shape = 's32[1]{0}', space=sflag, size = 0x4, scoped, tag = 'scoped memory for tpu_custom_call.1']
    #allocation11 [shape = 'u8[4096]{0}', space=vmem, size = 0x1000, scoped, tag = 'output window, operand 0, single buffered']
    %11 = vsyncpa [#allocation4], 0
    %12 = vsyncpa [#allocation7], 0
    %13 = vsyncpa [#allocation10], 0
    %14 = vsyncpa [#allocation5], 0
    // Predicated region
    $region2: #{tpu_custom_call.1} parent=1 // pred_check
      _
    $region3: #{tpu_custom_call.1} parent=1 // pred_check_branch
      %16 = sbr.rel (0) target = $region5
    $region4: #{tpu_custom_call.1} parent=1 // pred_region
      %s18 = ssub.s32 512, 512
      %19 = vsyncadd [#allocation4], %s18
      %s20 = sshll.u32 [#allocation3], 4
      %s21 = int_to_ptr.vmem [resolvable:$true] %s20
      %26 = dma.hbm_to_vmem [thread:$0]  %s0, 512, %s21, [#allocation4], 64, 64, 4
    $region5: #{tpu_custom_call.1} parent=1 // pred_fallthru
      _
    // Predicated region
    $region6: #{tpu_custom_call.1} parent=1 // pred_check
      _
    $region7: #{tpu_custom_call.1} parent=1 // pred_check_branch
      %28 = sbr.rel (0) target = $region9
    $region8: #{tpu_custom_call.1} parent=1 // pred_region
      %s30 = ssub.s32 2048, 2048
      %31 = vsyncadd [#allocation7], %s30
      %s32 = sshll.u32 [#allocation6], 4
      %s33 = int_to_ptr.vmem [resolvable:$true] %s32
      %38 = dma.hbm_to_vmem [thread:$0]  %s1, 2048, %s33, [#allocation7], 256, 256, 16
    $region9: #{tpu_custom_call.1} parent=1 // pred_fallthru
      _
    // Predicated region
    $region10: #{tpu_custom_call.1} parent=1 // pred_check
      _
    $region11: #{tpu_custom_call.1} parent=1 // pred_check_branch
      %40 = sbr.rel (0) target = $region13
    $region12: #{tpu_custom_call.1} parent=1 // pred_region
      %s42 = ssub.s32 4096, 4096
      %43 = vsyncadd [#allocation7], %s42
      %s44 = sshll.u32 [#allocation8], 4
      %s45 = int_to_ptr.vmem [resolvable:$true] %s44
      %50 = dma.hbm_to_vmem [thread:$0]  %s2, 4096, %s45, [#allocation7], 256, 256, 16
    $region13: #{tpu_custom_call.1} parent=1 // pred_fallthru
      _
    // Predicated region
    $region14: #{tpu_custom_call.1} parent=1 // pred_check
      _
    $region15: #{tpu_custom_call.1} parent=1 // pred_check_branch
      %52 = sbr.rel (0) target = $region17
    $region16: #{tpu_custom_call.1} parent=1 // pred_region
      _
    $region17: #{tpu_custom_call.1} parent=1 // pred_fallthru
      _
    // Predicated region
    $region18: #{tpu_custom_call.1} parent=1 // pred_check
      _
    $region19: #{tpu_custom_call.1} parent=1 // pred_check_branch
      %54 = sbr.rel (0) target = $region21
    $region20: #{tpu_custom_call.1} parent=1 // pred_region
      %s56 = ssub.s32 1024, 1024
      %57 = vsyncadd [#allocation10], %s56
      %s58 = sshll.u32 [#allocation9], 4
      %s59 = int_to_ptr.vmem [resolvable:$true] %s58
      %64 = dma.hbm_to_vmem [thread:$0]  %s4, 1024, %s59, [#allocation10], 64, 64, 4
    $region21: #{tpu_custom_call.1} parent=1 // pred_fallthru
      _
    // Predicated region
    $region22: #{tpu_custom_call.1} parent=1 // pred_check
      _
    $region23: #{tpu_custom_call.1} parent=1 // pred_check_branch
      %66 = sbr.rel (0) target = $region25
    $region24: #{tpu_custom_call.1} parent=1 // pred_region
      _
    $region25: #{tpu_custom_call.1} parent=1 // pred_fallthru
      _
    // Predicated region
    $region26: #{tpu_custom_call.1} parent=1 // pred_check
      _
    $region27: #{tpu_custom_call.1} parent=1 // pred_check_branch
      %68 = sbr.rel (0) target = $region29
    $region28: #{tpu_custom_call.1} parent=1 // pred_region
      %69 = dma.done [#allocation4], 512
    $region29: #{tpu_custom_call.1} parent=1 // pred_fallthru
      _
    // Predicated region
    $region30: #{tpu_custom_call.1} parent=1 // pred_check
      _
    $region31: #{tpu_custom_call.1} parent=1 // pred_check_branch
      %71 = sbr.rel (0) target = $region33
    $region32: #{tpu_custom_call.1} parent=1 // pred_region
      %72 = dma.done [#allocation7], 2048
    $region33: #{tpu_custom_call.1} parent=1 // pred_fallthru
      _
    // Predicated region
    $region34: #{tpu_custom_call.1} parent=1 // pred_check
      _
    $region35: #{tpu_custom_call.1} parent=1 // pred_check_branch
      %74 = sbr.rel (0) target = $region37
    $region36: #{tpu_custom_call.1} parent=1 // pred_region
      %75 = dma.done [#allocation7], 4096
    $region37: #{tpu_custom_call.1} parent=1 // pred_fallthru
      _
    // Predicated region
    $region38: #{tpu_custom_call.1} parent=1 // pred_check
      _
    $region39: #{tpu_custom_call.1} parent=1 // pred_check_branch
      %77 = sbr.rel (0) target = $region41
    $region40: #{tpu_custom_call.1} parent=1 // pred_region
      %78 = dma.done [#allocation10], 1024
    $region41: #{tpu_custom_call.1} parent=1 // pred_fallthru
      _
    %v80 = vld [vmem:[#allocation3] sm:$0xf]
    %v81 = vld [vmem:[#allocation3 + $0x4] sm:$0xf]
    %v82 = vld [vmem:[#allocation3 + $0x8] sm:$0xf]
    %v83 = vld [vmem:[#allocation3 + $0xc] sm:$0xf]
    %v84 = vld [vmem:[#allocation3 + $0x10] sm:$0xf]
    %v85 = vld [vmem:[#allocation3 + $0x14] sm:$0xf]
    %v86 = vld [vmem:[#allocation3 + $0x18] sm:$0xf]
    %v87 = vld [vmem:[#allocation3 + $0x1c] sm:$0xf]
    %v88 = vld [vmem:[#allocation6] sm:$0xff]
    %v89 = vld [vmem:[#allocation6 + $0x8] sm:$0xff]
    %v90 = vld [vmem:[#allocation6 + $0x10] sm:$0xff]
    %v91 = vld [vmem:[#allocation6 + $0x18] sm:$0xff]
    %v92 = vld [vmem:[#allocation6 + $0x20] sm:$0xff]
    %v93 = vld [vmem:[#allocation6 + $0x28] sm:$0xff]
    %v94 = vld [vmem:[#allocation6 + $0x30] sm:$0xff]
    %v95 = vld [vmem:[#allocation6 + $0x38] sm:$0xff]
    %v96 = vld [vmem:[#allocation6 + $0x40] sm:$0xff]
    %v97 = vld [vmem:[#allocation6 + $0x48] sm:$0xff]
    %v98 = vld [vmem:[#allocation6 + $0x50] sm:$0xff]
    %v99 = vld [vmem:[#allocation6 + $0x58] sm:$0xff]
    %v100 = vld [vmem:[#allocation6 + $0x60] sm:$0xff]
    %v101 = vld [vmem:[#allocation6 + $0x68] sm:$0xff]
    %v102 = vld [vmem:[#allocation6 + $0x70] sm:$0xff]
    %v103 = vld [vmem:[#allocation6 + $0x78] sm:$0xff]
    %v104 = vld [vmem:[%s3] sm:$0xf]
    %v106 = vlaneseq
    %v107 = vshrl.u32 %v106, 7
    %v108 = vsub.s32 0, %v107
    %v109 = vrot.slane %v104, %v108
    %v110 = vlaneseq
    %v111 = vshrl.u32 %v110, 7
    %v112 = vsub.s32 1, %v111
    %v113 = vrot.slane %v104, %v112
    %v114 = vlaneseq
    %v115 = vshrl.u32 %v114, 7
    %v116 = vsub.s32 2, %v115
    %v117 = vrot.slane %v104, %v116
    %v118 = vlaneseq
    %v119 = vshrl.u32 %v118, 7
    %v120 = vsub.s32 3, %v119
    %v121 = vrot.slane %v104, %v120
    %v134 = vunpack.c.l.b16 %v80
    %v135 = vunpack.c.l.b16 %v81
    %v136 = vunpack.c.l.b16 %v82
    %v137 = vunpack.c.l.b16 %v83
    %v138 = vunpack.c.l.b16 %v84
    %v139 = vunpack.c.l.b16 %v85
    %v140 = vunpack.c.l.b16 %v86
    %v141 = vunpack.c.l.b16 %v87
    %v142 = vpack.c.b16 %v135, %v134
    %v143 = vpack.c.b16 %v137, %v136
    %v144 = vpack.c.b16 %v139, %v138
    %v145 = vpack.c.b16 %v141, %v140
    %v162 = vunpack.c.l.b16 %v88
    %v163 = vunpack.c.h.b16 %v88
    %v164 = vunpack.c.l.b16 %v89
    %v165 = vunpack.c.h.b16 %v89
    %v166 = vunpack.c.l.b16 %v90
    %v167 = vunpack.c.h.b16 %v90
    %v168 = vunpack.c.l.b16 %v91
    %v169 = vunpack.c.h.b16 %v91
    %v170 = vunpack.c.l.b16 %v92
    %v171 = vunpack.c.h.b16 %v92
    %v172 = vunpack.c.l.b16 %v93
    %v173 = vunpack.c.h.b16 %v93
    %v174 = vunpack.c.l.b16 %v94
    %v175 = vunpack.c.h.b16 %v94
    %v176 = vunpack.c.l.b16 %v95
    %v177 = vunpack.c.h.b16 %v95
    %v178 = vunpack.c.l.b16 %v96
    %v179 = vunpack.c.h.b16 %v96
    %v180 = vunpack.c.l.b16 %v97
    %v181 = vunpack.c.h.b16 %v97
    %v182 = vunpack.c.l.b16 %v98
    %v183 = vunpack.c.h.b16 %v98
    %v184 = vunpack.c.l.b16 %v99
    %v185 = vunpack.c.h.b16 %v99
    %v186 = vunpack.c.l.b16 %v100
    %v187 = vunpack.c.h.b16 %v100
    %v188 = vunpack.c.l.b16 %v101
    %v189 = vunpack.c.h.b16 %v101
    %v190 = vunpack.c.l.b16 %v102
    %v191 = vunpack.c.h.b16 %v102
    %v192 = vunpack.c.l.b16 %v103
    %v193 = vunpack.c.h.b16 %v103
    %v194 = vpack.c.b16 %v166, %v162
    %v195 = vpack.c.b16 %v167, %v163
    %v196 = vpack.c.b16 %v168, %v164
    %v197 = vpack.c.b16 %v169, %v165
    %v198 = vpack.c.b16 %v174, %v170
    %v199 = vpack.c.b16 %v175, %v171
    %v200 = vpack.c.b16 %v176, %v172
    %v201 = vpack.c.b16 %v177, %v173
    %v202 = vpack.c.b16 %v182, %v178
    %v203 = vpack.c.b16 %v183, %v179
    %v204 = vpack.c.b16 %v184, %v180
    %v205 = vpack.c.b16 %v185, %v181
    %v206 = vpack.c.b16 %v190, %v186
    %v207 = vpack.c.b16 %v191, %v187
    %v208 = vpack.c.b16 %v192, %v188
    %v209 = vpack.c.b16 %v193, %v189
    %vm226 = vcmask 523264
    %v228 = vsel %vm226, %v142, 0
    %v231 = vsel %vm226, %v143, 0
    %v234 = vsel %vm226, %v144, 0
    %v237 = vsel %vm226, %v145, 0
    %239 = vmatprep.subr.bf16.mxu0 %v195
    %240 = vmatpush1.bf16.msra.mxu0 %v194
    %241 = vmatprep.subr.bf16.mxu0 %v199
    %242 = vmatpush1.bf16.msra.mxu0 %v198
    %243 = vmatprep.subr.bf16.mxu0 %v203
    %244 = vmatpush1.bf16.msra.mxu0 %v202
    %245 = vmatprep.subr.bf16.mxu0 %v207
    %246 = vmatpush1.bf16.msra.mxu0 %v206
    %247 = vmatprep.subr.bf16.mxu0 0
    %248 = vmatpush1.bf16.msra.mxu0 0
    %249 = vmatprep.subr.bf16.mxu0 0
    %250 = vmatpush1.bf16.msra.mxu0 0
    %251 = vmatprep.subr.bf16.mxu0 0
    %252 = vmatpush1.bf16.msra.mxu0 0
    %253 = vmatprep.subr.bf16.mxu0 0
    %254 = vmatpush1.bf16.msra.mxu0 0
    %255 = vmatprep.subr.bf16.mxu0 0
    %256 = vmatpush1.bf16.msra.mxu0 0
    %257 = vmatprep.subr.bf16.mxu0 0
    %258 = vmatpush1.bf16.msra.mxu0 0
    %259 = vmatprep.subr.bf16.mxu0 0
    %260 = vmatpush1.bf16.msra.mxu0 0
    %261 = vmatprep.subr.bf16.mxu0 0
    %262 = vmatpush1.bf16.msra.mxu0 0
    %263 = vmatprep.subr.bf16.mxu0 0
    %264 = vmatpush1.bf16.msra.mxu0 0
    %265 = vmatprep.subr.bf16.mxu0 0
    %266 = vmatpush1.bf16.msra.mxu0 0
    %267 = vmatprep.subr.bf16.mxu0 0
    %268 = vmatpush1.bf16.msra.mxu0 0
    %269 = vmatprep.subr.bf16.mxu0 0
    %270 = vmatpush1.bf16.msra.mxu0 0
    %271 = vmatprep.mubr.bf16.mxu0 0
    %272 = vmatmul.mubr.bf16.gmra.mrb[0].mxu0 %v228
    %v273 = vpop.f32.mrb[0].mxu0
    %v274 = vadd.f32 %v109, %v273
    %v275 = vpop.f32.mrb[0].mxu0
    %v276 = vadd.f32 %v113, %v275
    %v277 = vpop.f32.mrb[0].mxu0
    %v278 = vadd.f32 %v109, %v277
    %v279 = vpop.f32.mrb[0].mxu0
    %v280 = vadd.f32 %v113, %v279
    %281 = vmatprep.mubr.bf16.mxu0 0
    %282 = vmatmul.mubr.bf16.gmra.mrb[0].mxu0 %v231
    %v283 = vpop.f32.mrb[0].mxu0
    %v284 = vadd.f32 %v109, %v283
    %v285 = vpop.f32.mrb[0].mxu0
    %v286 = vadd.f32 %v113, %v285
    %v287 = vpop.f32.mrb[0].mxu0
    %v288 = vadd.f32 %v109, %v287
    %v289 = vpop.f32.mrb[0].mxu0
    %v290 = vadd.f32 %v113, %v289
    %291 = vmatprep.mubr.bf16.mxu0 0
    %292 = vmatmul.mubr.bf16.gmra.mrb[0].mxu0 %v234
    %v293 = vpop.f32.mrb[0].mxu0
    %v294 = vadd.f32 %v109, %v293
    %v295 = vpop.f32.mrb[0].mxu0
    %v296 = vadd.f32 %v113, %v295
    %v297 = vpop.f32.mrb[0].mxu0
    %v298 = vadd.f32 %v109, %v297
    %v299 = vpop.f32.mrb[0].mxu0
    %v300 = vadd.f32 %v113, %v299
    %301 = vmatprep.mubr.bf16.mxu0 0
    %302 = vmatmul.mubr.bf16.gmra.mrb[0].mxu0 %v237
    %v303 = vpop.f32.mrb[0].mxu0
    %v304 = vadd.f32 %v109, %v303
    %v305 = vpop.f32.mrb[0].mxu0
    %v306 = vadd.f32 %v113, %v305
    %v307 = vpop.f32.mrb[0].mxu0
    %v308 = vadd.f32 %v109, %v307
    %v309 = vpop.f32.mrb[0].mxu0
    %v310 = vadd.f32 %v113, %v309
    %311 = vdwg.mxu0
    %312 = vmatprep.subr.bf16.mxu0 %v197
    %313 = vmatpush1.bf16.msra.mxu0 %v196
    %314 = vmatprep.subr.bf16.mxu0 %v201
    %315 = vmatpush1.bf16.msra.mxu0 %v200
    %316 = vmatprep.subr.bf16.mxu0 %v205
    %317 = vmatpush1.bf16.msra.mxu0 %v204
    %318 = vmatprep.subr.bf16.mxu0 %v209
    %319 = vmatpush1.bf16.msra.mxu0 %v208
    %320 = vmatprep.subr.bf16.mxu0 0
    %321 = vmatpush1.bf16.msra.mxu0 0
    %322 = vmatprep.subr.bf16.mxu0 0
    %323 = vmatpush1.bf16.msra.mxu0 0
    %324 = vmatprep.subr.bf16.mxu0 0
    %325 = vmatpush1.bf16.msra.mxu0 0
    %326 = vmatprep.subr.bf16.mxu0 0
    %327 = vmatpush1.bf16.msra.mxu0 0
    %328 = vmatprep.subr.bf16.mxu0 0
    %329 = vmatpush1.bf16.msra.mxu0 0
    %330 = vmatprep.subr.bf16.mxu0 0
    %331 = vmatpush1.bf16.msra.mxu0 0
    %332 = vmatprep.subr.bf16.mxu0 0
    %333 = vmatpush1.bf16.msra.mxu0 0
    %334 = vmatprep.subr.bf16.mxu0 0
    %335 = vmatpush1.bf16.msra.mxu0 0
    %336 = vmatprep.subr.bf16.mxu0 0
    %337 = vmatpush1.bf16.msra.mxu0 0
    %338 = vmatprep.subr.bf16.mxu0 0
    %339 = vmatpush1.bf16.msra.mxu0 0
    %340 = vmatprep.subr.bf16.mxu0 0
    %341 = vmatpush1.bf16.msra.mxu0 0
    %342 = vmatprep.subr.bf16.mxu0 0
    %343 = vmatpush1.bf16.msra.mxu0 0
    %344 = vmatprep.mubr.bf16.mxu0 0
    %345 = vmatmul.mubr.bf16.gmra.mrb[0].mxu0 %v228
    %v346 = vpop.f32.mrb[0].mxu0
    %v347 = vadd.f32 %v117, %v346
    %v348 = vpop.f32.mrb[0].mxu0
    %v349 = vadd.f32 %v121, %v348
    %v350 = vpop.f32.mrb[0].mxu0
    %v351 = vadd.f32 %v117, %v350
    %v352 = vpop.f32.mrb[0].mxu0
    %v353 = vadd.f32 %v121, %v352
    %354 = vmatprep.mubr.bf16.mxu0 0
    %355 = vmatmul.mubr.bf16.gmra.mrb[0].mxu0 %v231
    %v356 = vpop.f32.mrb[0].mxu0
    %v357 = vadd.f32 %v117, %v356
    %v358 = vpop.f32.mrb[0].mxu0
    %v359 = vadd.f32 %v121, %v358
    %v360 = vpop.f32.mrb[0].mxu0
    %v361 = vadd.f32 %v117, %v360
    %v362 = vpop.f32.mrb[0].mxu0
    %v363 = vadd.f32 %v121, %v362
    %364 = vmatprep.mubr.bf16.mxu0 0
    %365 = vmatmul.mubr.bf16.gmra.mrb[0].mxu0 %v234
    %v366 = vpop.f32.mrb[0].mxu0
    %v367 = vadd.f32 %v117, %v366
    %v368 = vpop.f32.mrb[0].mxu0
    %v369 = vadd.f32 %v121, %v368
    %v370 = vpop.f32.mrb[0].mxu0
    %v371 = vadd.f32 %v117, %v370
    %v372 = vpop.f32.mrb[0].mxu0
    %v373 = vadd.f32 %v121, %v372
    %374 = vmatprep.mubr.bf16.mxu0 0
    %375 = vmatmul.mubr.bf16.gmra.mrb[0].mxu0 %v237
    %v376 = vpop.f32.mrb[0].mxu0
    %v377 = vadd.f32 %v117, %v376
    %v378 = vpop.f32.mrb[0].mxu0
    %v379 = vadd.f32 %v121, %v378
    %v380 = vpop.f32.mrb[0].mxu0
    %v381 = vadd.f32 %v117, %v380
    %v382 = vpop.f32.mrb[0].mxu0
    %v383 = vadd.f32 %v121, %v382
    %384 = vdwg.mxu0
    %385 = vst [vmem:[#allocation2] sm:$0xff] %v274
    %386 = vst [vmem:[#allocation2 + $0x8] sm:$0xff] %v276
    %387 = vst [vmem:[#allocation2 + $0x10] sm:$0xff] %v347
    %388 = vst [vmem:[#allocation2 + $0x18] sm:$0xff] %v349
    %389 = vst [vmem:[#allocation2 + $0x20] sm:$0xff] %v278
    %390 = vst [vmem:[#allocation2 + $0x28] sm:$0xff] %v280
    %391 = vst [vmem:[#allocation2 + $0x30] sm:$0xff] %v351
    %392 = vst [vmem:[#allocation2 + $0x38] sm:$0xff] %v353
    %393 = vst [vmem:[#allocation2 + $0x40] sm:$0xff] %v284
    %394 = vst [vmem:[#allocation2 + $0x48] sm:$0xff] %v286
    %395 = vst [vmem:[#allocation2 + $0x50] sm:$0xff] %v357
    %396 = vst [vmem:[#allocation2 + $0x58] sm:$0xff] %v359
    %397 = vst [vmem:[#allocation2 + $0x60] sm:$0xff] %v288
    %398 = vst [vmem:[#allocation2 + $0x68] sm:$0xff] %v290
    %399 = vst [vmem:[#allocation2 + $0x70] sm:$0xff] %v361
    %400 = vst [vmem:[#allocation2 + $0x78] sm:$0xff] %v363
    %401 = vst [vmem:[#allocation2 + $0x80] sm:$0xff] %v294
    %402 = vst [vmem:[#allocation2 + $0x88] sm:$0xff] %v296
    %403 = vst [vmem:[#allocation2 + $0x90] sm:$0xff] %v367
    %404 = vst [vmem:[#allocation2 + $0x98] sm:$0xff] %v369
    %405 = vst [vmem:[#allocation2 + $0xa0] sm:$0xff] %v298
    %406 = vst [vmem:[#allocation2 + $0xa8] sm:$0xff] %v300
    %407 = vst [vmem:[#allocation2 + $0xb0] sm:$0xff] %v371
    %408 = vst [vmem:[#allocation2 + $0xb8] sm:$0xff] %v373
    %409 = vst [vmem:[#allocation2 + $0xc0] sm:$0xff] %v304
    %410 = vst [vmem:[#allocation2 + $0xc8] sm:$0xff] %v306
    %411 = vst [vmem:[#allocation2 + $0xd0] sm:$0xff] %v377
    %412 = vst [vmem:[#allocation2 + $0xd8] sm:$0xff] %v379
    %413 = vst [vmem:[#allocation2 + $0xe0] sm:$0xff] %v308
    %414 = vst [vmem:[#allocation2 + $0xe8] sm:$0xff] %v310
    %415 = vst [vmem:[#allocation2 + $0xf0] sm:$0xff] %v381
    %416 = vst [vmem:[#allocation2 + $0xf8] sm:$0xff] %v383
    %v417 = vld [vmem:[#allocation8] sm:$0xff]
    %v418 = vld [vmem:[#allocation8 + $0x8] sm:$0xff]
    %v419 = vld [vmem:[#allocation8 + $0x10] sm:$0xff]
    %v420 = vld [vmem:[#allocation8 + $0x18] sm:$0xff]
    %v421 = vld [vmem:[#allocation8 + $0x20] sm:$0xff]
    %v422 = vld [vmem:[#allocation8 + $0x28] sm:$0xff]
    %v423 = vld [vmem:[#allocation8 + $0x30] sm:$0xff]
    %v424 = vld [vmem:[#allocation8 + $0x38] sm:$0xff]
    %v425 = vld [vmem:[#allocation8 + $0x40] sm:$0xff]
    %v426 = vld [vmem:[#allocation8 + $0x48] sm:$0xff]
    %v427 = vld [vmem:[#allocation8 + $0x50] sm:$0xff]
    %v428 = vld [vmem:[#allocation8 + $0x58] sm:$0xff]
    %v429 = vld [vmem:[#allocation8 + $0x60] sm:$0xff]
    %v430 = vld [vmem:[#allocation8 + $0x68] sm:$0xff]
    %v431 = vld [vmem:[#allocation8 + $0x70] sm:$0xff]
    %v432 = vld [vmem:[#allocation8 + $0x78] sm:$0xff]
    %v433 = vld [vmem:[#allocation8 + $0x80] sm:$0xff]
    %v434 = vld [vmem:[#allocation8 + $0x88] sm:$0xff]
    %v435 = vld [vmem:[#allocation8 + $0x90] sm:$0xff]
    %v436 = vld [vmem:[#allocation8 + $0x98] sm:$0xff]
    %v437 = vld [vmem:[#allocation8 + $0xa0] sm:$0xff]
    %v438 = vld [vmem:[#allocation8 + $0xa8] sm:$0xff]
    %v439 = vld [vmem:[#allocation8 + $0xb0] sm:$0xff]
    %v440 = vld [vmem:[#allocation8 + $0xb8] sm:$0xff]
    %v441 = vld [vmem:[#allocation8 + $0xc0] sm:$0xff]
    %v442 = vld [vmem:[#allocation8 + $0xc8] sm:$0xff]
    %v443 = vld [vmem:[#allocation8 + $0xd0] sm:$0xff]
    %v444 = vld [vmem:[#allocation8 + $0xd8] sm:$0xff]
    %v445 = vld [vmem:[#allocation8 + $0xe0] sm:$0xff]
    %v446 = vld [vmem:[#allocation8 + $0xe8] sm:$0xff]
    %v447 = vld [vmem:[#allocation8 + $0xf0] sm:$0xff]
    %v448 = vld [vmem:[#allocation8 + $0xf8] sm:$0xff]
    %v449 = vld [vmem:[#allocation2] sm:$0xff]
    %v450 = vld [vmem:[#allocation2 + $0x8] sm:$0xff]
    %v451 = vld [vmem:[#allocation2 + $0x10] sm:$0xff]
    %v452 = vld [vmem:[#allocation2 + $0x18] sm:$0xff]
    %v485 = vunpack.c.l.b16 %v417
    %v486 = vunpack.c.h.b16 %v417
    %v487 = vunpack.c.l.b16 %v418
    %v488 = vunpack.c.h.b16 %v418
    %v489 = vunpack.c.l.b16 %v419
    %v490 = vunpack.c.h.b16 %v419
    %v491 = vunpack.c.l.b16 %v420
    %v492 = vunpack.c.h.b16 %v420
    %v493 = vunpack.c.l.b16 %v421
    %v494 = vunpack.c.h.b16 %v421
    %v495 = vunpack.c.l.b16 %v422
    %v496 = vunpack.c.h.b16 %v422
    %v497 = vunpack.c.l.b16 %v423
    %v498 = vunpack.c.h.b16 %v423
    %v499 = vunpack.c.l.b16 %v424
    %v500 = vunpack.c.h.b16 %v424
    %v501 = vunpack.c.l.b16 %v425
    %v502 = vunpack.c.h.b16 %v425
    %v503 = vunpack.c.l.b16 %v426
    %v504 = vunpack.c.h.b16 %v426
    %v505 = vunpack.c.l.b16 %v427
    %v506 = vunpack.c.h.b16 %v427
    %v507 = vunpack.c.l.b16 %v428
    %v508 = vunpack.c.h.b16 %v428
    %v509 = vunpack.c.l.b16 %v429
    %v510 = vunpack.c.h.b16 %v429
    %v511 = vunpack.c.l.b16 %v430
    %v512 = vunpack.c.h.b16 %v430
    %v513 = vunpack.c.l.b16 %v431
    %v514 = vunpack.c.h.b16 %v431
    %v515 = vunpack.c.l.b16 %v432
    %v516 = vunpack.c.h.b16 %v432
    %v517 = vunpack.c.l.b16 %v433
    %v518 = vunpack.c.h.b16 %v433
    %v519 = vunpack.c.l.b16 %v434
    %v520 = vunpack.c.h.b16 %v434
    %v521 = vunpack.c.l.b16 %v435
    %v522 = vunpack.c.h.b16 %v435
    %v523 = vunpack.c.l.b16 %v436
    %v524 = vunpack.c.h.b16 %v436
    %v525 = vunpack.c.l.b16 %v437
    %v526 = vunpack.c.h.b16 %v437
    %v527 = vunpack.c.l.b16 %v438
    %v528 = vunpack.c.h.b16 %v438
    %v529 = vunpack.c.l.b16 %v439
    %v530 = vunpack.c.h.b16 %v439
    %v531 = vunpack.c.l.b16 %v440
    %v532 = vunpack.c.h.b16 %v440
    %v533 = vunpack.c.l.b16 %v441
    %v534 = vunpack.c.h.b16 %v441
    %v535 = vunpack.c.l.b16 %v442
    %v536 = vunpack.c.h.b16 %v442
    %v537 = vunpack.c.l.b16 %v443
    %v538 = vunpack.c.h.b16 %v443
    %v539 = vunpack.c.l.b16 %v444
    %v540 = vunpack.c.h.b16 %v444
    %v541 = vunpack.c.l.b16 %v445
    %v542 = vunpack.c.h.b16 %v445
    %v543 = vunpack.c.l.b16 %v446
    %v544 = vunpack.c.h.b16 %v446
    %v545 = vunpack.c.l.b16 %v447
    %v546 = vunpack.c.h.b16 %v447
    %v547 = vunpack.c.l.b16 %v448
    %v548 = vunpack.c.h.b16 %v448
    %v549 = vpack.c.b16 %v489, %v485
    %v550 = vpack.c.b16 %v490, %v486
    %v551 = vpack.c.b16 %v491, %v487
    %v552 = vpack.c.b16 %v492, %v488
    %v553 = vpack.c.b16 %v497, %v493
    %v554 = vpack.c.b16 %v498, %v494
    %v555 = vpack.c.b16 %v499, %v495
    %v556 = vpack.c.b16 %v500, %v496
    %v557 = vpack.c.b16 %v505, %v501
    %v558 = vpack.c.b16 %v506, %v502
    %v559 = vpack.c.b16 %v507, %v503
    %v560 = vpack.c.b16 %v508, %v504
    %v561 = vpack.c.b16 %v513, %v509
    %v562 = vpack.c.b16 %v514, %v510
    %v563 = vpack.c.b16 %v515, %v511
    %v564 = vpack.c.b16 %v516, %v512
    %v565 = vpack.c.b16 %v521, %v517
    %v566 = vpack.c.b16 %v522, %v518
    %v567 = vpack.c.b16 %v523, %v519
    %v568 = vpack.c.b16 %v524, %v520
    %v569 = vpack.c.b16 %v529, %v525
    %v570 = vpack.c.b16 %v530, %v526
    %v571 = vpack.c.b16 %v531, %v527
    %v572 = vpack.c.b16 %v532, %v528
    %v573 = vpack.c.b16 %v537, %v533
    %v574 = vpack.c.b16 %v538, %v534
    %v575 = vpack.c.b16 %v539, %v535
    %v576 = vpack.c.b16 %v540, %v536
    %v577 = vpack.c.b16 %v545, %v541
    %v578 = vpack.c.b16 %v546, %v542
    %v579 = vpack.c.b16 %v547, %v543
    %v580 = vpack.c.b16 %v548, %v544
    %613 = vmatprep.subr.bf16.mxu0 %v550
    %614 = vmatpush1.bf16.msra.mxu0 %v549
    %615 = vmatprep.subr.bf16.mxu0 %v554
    %616 = vmatpush1.bf16.msra.mxu0 %v553
    %617 = vmatprep.subr.bf16.mxu0 %v558
    %618 = vmatpush1.bf16.msra.mxu0 %v557
    %619 = vmatprep.subr.bf16.mxu0 %v562
    %620 = vmatpush1.bf16.msra.mxu0 %v561
    %621 = vmatprep.subr.bf16.mxu0 %v566
    %622 = vmatpush1.bf16.msra.mxu0 %v565
    %623 = vmatprep.subr.bf16.mxu0 %v570
    %624 = vmatpush1.bf16.msra.mxu0 %v569
    %625 = vmatprep.subr.bf16.mxu0 %v574
    %626 = vmatpush1.bf16.msra.mxu0 %v573
    %627 = vmatprep.subr.bf16.mxu0 %v578
    %628 = vmatpush1.bf16.msra.mxu0 %v577
    %629 = vmatprep.subr.bf16.mxu0 0
    %630 = vmatpush1.bf16.msra.mxu0 0
    %631 = vmatprep.subr.bf16.mxu0 0
    %632 = vmatpush1.bf16.msra.mxu0 0
    %633 = vmatprep.subr.bf16.mxu0 0
    %634 = vmatpush1.bf16.msra.mxu0 0
    %635 = vmatprep.subr.bf16.mxu0 0
    %636 = vmatpush1.bf16.msra.mxu0 0
    %637 = vmatprep.subr.bf16.mxu0 0
    %638 = vmatpush1.bf16.msra.mxu0 0
    %639 = vmatprep.subr.bf16.mxu0 0
    %640 = vmatpush1.bf16.msra.mxu0 0
    %641 = vmatprep.subr.bf16.mxu0 0
    %642 = vmatpush1.bf16.msra.mxu0 0
    %643 = vmatprep.subr.bf16.mxu0 0
    %644 = vmatpush1.bf16.msra.mxu0 0
    %645 = vmatprep.mubr.bf16.mxu0 0
    %646 = vmatmul.mubr.bf16.gmra.mrb[0].mxu0 0
    %v647 = vpop.f32.mrb[0].mxu0
    %v648 = vadd.f32 0.0, %v647
    %v649 = vpop.f32.mrb[0].mxu0
    %v650 = vadd.f32 0.0, %v649
    %v651 = vpop.f32.mrb[0].mxu0
    %v652 = vpop.f32.mrb[0].mxu0
    %653 = vdwg.mxu0
    %654 = vmatprep.subr.bf16.mxu0 %v552
    %655 = vmatpush1.bf16.msra.mxu0 %v551
    %656 = vmatprep.subr.bf16.mxu0 %v556
    %657 = vmatpush1.bf16.msra.mxu0 %v555
    %658 = vmatprep.subr.bf16.mxu0 %v560
    %659 = vmatpush1.bf16.msra.mxu0 %v559
    %660 = vmatprep.subr.bf16.mxu0 %v564
    %661 = vmatpush1.bf16.msra.mxu0 %v563
    %662 = vmatprep.subr.bf16.mxu0 %v568
    %663 = vmatpush1.bf16.msra.mxu0 %v567
    %664 = vmatprep.subr.bf16.mxu0 %v572
    %665 = vmatpush1.bf16.msra.mxu0 %v571
    %666 = vmatprep.subr.bf16.mxu0 %v576
    %667 = vmatpush1.bf16.msra.mxu0 %v575
    %668 = vmatprep.subr.bf16.mxu0 %v580
    %669 = vmatpush1.bf16.msra.mxu0 %v579
    %670 = vmatprep.subr.bf16.mxu0 0
    %671 = vmatpush1.bf16.msra.mxu0 0
    %672 = vmatprep.subr.bf16.mxu0 0
    %673 = vmatpush1.bf16.msra.mxu0 0
    %674 = vmatprep.subr.bf16.mxu0 0
    %675 = vmatpush1.bf16.msra.mxu0 0
    %676 = vmatprep.subr.bf16.mxu0 0
    %677 = vmatpush1.bf16.msra.mxu0 0
    %678 = vmatprep.subr.bf16.mxu0 0
    %679 = vmatpush1.bf16.msra.mxu0 0
    %680 = vmatprep.subr.bf16.mxu0 0
    %681 = vmatpush1.bf16.msra.mxu0 0
    %682 = vmatprep.subr.bf16.mxu0 0
    %683 = vmatpush1.bf16.msra.mxu0 0
    %684 = vmatprep.subr.bf16.mxu0 0
    %685 = vmatpush1.bf16.msra.mxu0 0
    %686 = vmatprep.mubr.bf16.mxu0 0
    %687 = vmatmul.mubr.bf16.gmra.mrb[0].mxu0 0
    %v688 = vpop.f32.mrb[0].mxu0
    %v689 = vadd.f32 0.0, %v688
    %v690 = vpop.f32.mrb[0].mxu0
    %v691 = vadd.f32 0.0, %v690
    %v692 = vpop.f32.mrb[0].mxu0
    %v693 = vpop.f32.mrb[0].mxu0
    %694 = vdwg.mxu0
    %v695 = vadd.f32 %v449, %v648
    %v696 = vadd.f32 %v450, %v650
    %v697 = vadd.f32 %v451, %v689
    %v698 = vadd.f32 %v452, %v691
    %v699 = vxor.u32 %v695, 2147483648
    %v700 = vmul.f32 %v699, 1.442695
    %v701 = vpow.pop %v700
    %v702 = vadd.f32 %v701, 1.0
    %v703 = vrcp.pop %v702
    %v704 = vmul.f32 1.0, %v703
    %v705 = vxor.u32 %v696, 2147483648
    %v706 = vmul.f32 %v705, 1.442695
    %v707 = vpow.pop %v706
    %v708 = vadd.f32 %v707, 1.0
    %v709 = vrcp.pop %v708
    %v710 = vmul.f32 1.0, %v709
    %v711 = vtanh.pop %v697
    %v712 = vxor.u32 %v698, 2147483648
    %v713 = vmul.f32 %v712, 1.442695
    %v714 = vpow.pop %v713
    %v715 = vadd.f32 %v714, 1.0
    %v716 = vrcp.pop %v715
    %v717 = vmul.f32 1.0, %v716
    %v718 = vmul.f32 %v710, 0.0
    %v719 = vmul.f32 %v704, %v711
    %v720 = vadd.f32 %v718, %v719
    %v721 = vtanh.pop %v720
    %v722 = vmul.f32 %v717, %v721
    %v723 = vld [vmem:[#allocation2 + $0x20] sm:$0xff]
    %v724 = vld [vmem:[#allocation2 + $0x28] sm:$0xff]
    %v725 = vld [vmem:[#allocation2 + $0x30] sm:$0xff]
    %v726 = vld [vmem:[#allocation2 + $0x38] sm:$0xff]
    %v727 = vpack.c.bf16 %v722, %v722
    %728 = vmatprep.subr.bf16.mxu0 %v550
    %729 = vmatpush1.bf16.msra.mxu0 %v549
    %730 = vmatprep.subr.bf16.mxu0 %v554
    %731 = vmatpush1.bf16.msra.mxu0 %v553
    %732 = vmatprep.subr.bf16.mxu0 %v558
    %733 = vmatpush1.bf16.msra.mxu0 %v557
    %734 = vmatprep.subr.bf16.mxu0 %v562
    %735 = vmatpush1.bf16.msra.mxu0 %v561
    %736 = vmatprep.subr.bf16.mxu0 %v566
    %737 = vmatpush1.bf16.msra.mxu0 %v565
    %738 = vmatprep.subr.bf16.mxu0 %v570
    %739 = vmatpush1.bf16.msra.mxu0 %v569
    %740 = vmatprep.subr.bf16.mxu0 %v574
    %741 = vmatpush1.bf16.msra.mxu0 %v573
    %742 = vmatprep.subr.bf16.mxu0 %v578
    %743 = vmatpush1.bf16.msra.mxu0 %v577
    %744 = vmatprep.subr.bf16.mxu0 0
    %745 = vmatpush1.bf16.msra.mxu0 0
    %746 = vmatprep.subr.bf16.mxu0 0
    %747 = vmatpush1.bf16.msra.mxu0 0
    %748 = vmatprep.subr.bf16.mxu0 0
    %749 = vmatpush1.bf16.msra.mxu0 0
    %750 = vmatprep.subr.bf16.mxu0 0
    %751 = vmatpush1.bf16.msra.mxu0 0
    %752 = vmatprep.subr.bf16.mxu0 0
    %753 = vmatpush1.bf16.msra.mxu0 0
    %754 = vmatprep.subr.bf16.mxu0 0
    %755 = vmatpush1.bf16.msra.mxu0 0
    %756 = vmatprep.subr.bf16.mxu0 0
    %757 = vmatpush1.bf16.msra.mxu0 0
    %758 = vmatprep.subr.bf16.mxu0 0
    %759 = vmatpush1.bf16.msra.mxu0 0
    %760 = vmatprep.mubr.bf16.mxu0 0
    %761 = vmatmul.mubr.bf16.gmra.mrb[0].mxu0 %v727
    %v762 = vpop.f32.mrb[0].mxu0
    %v763 = vadd.f32 0.0, %v762
    %v764 = vpop.f32.mrb[0].mxu0
    %v765 = vadd.f32 0.0, %v764
    %v766 = vpop.f32.mrb[0].mxu0
    %v767 = vpop.f32.mrb[0].mxu0
    %768 = vdwg.mxu0
    %769 = vmatprep.subr.bf16.mxu0 %v552
    %770 = vmatpush1.bf16.msra.mxu0 %v551
    %771 = vmatprep.subr.bf16.mxu0 %v556
    %772 = vmatpush1.bf16.msra.mxu0 %v555
    %773 = vmatprep.subr.bf16.mxu0 %v560
    %774 = vmatpush1.bf16.msra.mxu0 %v559
    %775 = vmatprep.subr.bf16.mxu0 %v564
    %776 = vmatpush1.bf16.msra.mxu0 %v563
    %777 = vmatprep.subr.bf16.mxu0 %v568
    %778 = vmatpush1.bf16.msra.mxu0 %v567
    %779 = vmatprep.subr.bf16.mxu0 %v572
    %780 = vmatpush1.bf16.msra.mxu0 %v571
    %781 = vmatprep.subr.bf16.mxu0 %v576
    %782 = vmatpush1.bf16.msra.mxu0 %v575
    %783 = vmatprep.subr.bf16.mxu0 %v580
    %784 = vmatpush1.bf16.msra.mxu0 %v579
    %785 = vmatprep.subr.bf16.mxu0 0
    %786 = vmatpush1.bf16.msra.mxu0 0
    %787 = vmatprep.subr.bf16.mxu0 0
    %788 = vmatpush1.bf16.msra.mxu0 0
    %789 = vmatprep.subr.bf16.mxu0 0
    %790 = vmatpush1.bf16.msra.mxu0 0
    %791 = vmatprep.subr.bf16.mxu0 0
    %792 = vmatpush1.bf16.msra.mxu0 0
    %793 = vmatprep.subr.bf16.mxu0 0
    %794 = vmatpush1.bf16.msra.mxu0 0
    %795 = vmatprep.subr.bf16.mxu0 0
    %796 = vmatpush1.bf16.msra.mxu0 0
    %797 = vmatprep.subr.bf16.mxu0 0
    %798 = vmatpush1.bf16.msra.mxu0 0
    %799 = vmatprep.subr.bf16.mxu0 0
    %800 = vmatpush1.bf16.msra.mxu0 0
    %801 = vmatprep.mubr.bf16.mxu0 0
    %802 = vmatmul.mubr.bf16.gmra.mrb[0].mxu0 %v727
    %v803 = vpop.f32.mrb[0].mxu0
    %v804 = vadd.f32 0.0, %v803
    %v805 = vpop.f32.mrb[0].mxu0
    %v806 = vadd.f32 0.0, %v805
    %v807 = vpop.f32.mrb[0].mxu0
    %v808 = vpop.f32.mrb[0].mxu0
    %809 = vdwg.mxu0
    %v810 = vadd.f32 %v723, %v763
    %v811 = vadd.f32 %v724, %v765
    %v812 = vadd.f32 %v725, %v804
    %v813 = vadd.f32 %v726, %v806
    %v814 = vxor.u32 %v810, 2147483648
    %v815 = vmul.f32 %v814, 1.442695
    %v816 = vpow.pop %v815
    %v817 = vadd.f32 %v816, 1.0
    %v818 = vrcp.pop %v817
    %v819 = vmul.f32 1.0, %v818
    %v820 = vxor.u32 %v811, 2147483648
    %v821 = vmul.f32 %v820, 1.442695
    %v822 = vpow.pop %v821
    %v823 = vadd.f32 %v822, 1.0
    %v824 = vrcp.pop %v823
    %v825 = vmul.f32 1.0, %v824
    %v826 = vtanh.pop %v812
    %v827 = vxor.u32 %v813, 2147483648
    %v828 = vmul.f32 %v827, 1.442695
    %v829 = vpow.pop %v828
    %v830 = vadd.f32 %v829, 1.0
    %v831 = vrcp.pop %v830
    %v832 = vmul.f32 1.0, %v831
    %v833 = vmul.f32 %v825, %v720
    %v834 = vmul.f32 %v819, %v826
    %v835 = vadd.f32 %v833, %v834
    %v836 = vtanh.pop %v835
    %v837 = vmul.f32 %v832, %v836
    %v838 = vld [vmem:[#allocation2 + $0x40] sm:$0xff]
    %v839 = vld [vmem:[#allocation2 + $0x48] sm:$0xff]
    %v840 = vld [vmem:[#allocation2 + $0x50] sm:$0xff]
    %v841 = vld [vmem:[#allocation2 + $0x58] sm:$0xff]
    %v842 = vpack.c.bf16 %v837, %v837
    %843 = vmatprep.subr.bf16.mxu0 %v550
    %844 = vmatpush1.bf16.msra.mxu0 %v549
    %845 = vmatprep.subr.bf16.mxu0 %v554
    %846 = vmatpush1.bf16.msra.mxu0 %v553
    %847 = vmatprep.subr.bf16.mxu0 %v558
    %848 = vmatpush1.bf16.msra.mxu0 %v557
    %849 = vmatprep.subr.bf16.mxu0 %v562
    %850 = vmatpush1.bf16.msra.mxu0 %v561
    %851 = vmatprep.subr.bf16.mxu0 %v566
    %852 = vmatpush1.bf16.msra.mxu0 %v565
    %853 = vmatprep.subr.bf16.mxu0 %v570
    %854 = vmatpush1.bf16.msra.mxu0 %v569
    %855 = vmatprep.subr.bf16.mxu0 %v574
    %856 = vmatpush1.bf16.msra.mxu0 %v573
    %857 = vmatprep.subr.bf16.mxu0 %v578
    %858 = vmatpush1.bf16.msra.mxu0 %v577
    %859 = vmatprep.subr.bf16.mxu0 0
    %860 = vmatpush1.bf16.msra.mxu0 0
    %861 = vmatprep.subr.bf16.mxu0 0
    %862 = vmatpush1.bf16.msra.mxu0 0
    %863 = vmatprep.subr.bf16.mxu0 0
    %864 = vmatpush1.bf16.msra.mxu0 0
    %865 = vmatprep.subr.bf16.mxu0 0
    %866 = vmatpush1.bf16.msra.mxu0 0
    %867 = vmatprep.subr.bf16.mxu0 0
    %868 = vmatpush1.bf16.msra.mxu0 0
    %869 = vmatprep.subr.bf16.mxu0 0
    %870 = vmatpush1.bf16.msra.mxu0 0
    %871 = vmatprep.subr.bf16.mxu0 0
    %872 = vmatpush1.bf16.msra.mxu0 0
    %873 = vmatprep.subr.bf16.mxu0 0
    %874 = vmatpush1.bf16.msra.mxu0 0
    %875 = vmatprep.mubr.bf16.mxu0 0
    %876 = vmatmul.mubr.bf16.gmra.mrb[0].mxu0 %v842
    %v877 = vpop.f32.mrb[0].mxu0
    %v878 = vadd.f32 0.0, %v877
    %v879 = vpop.f32.mrb[0].mxu0
    %v880 = vadd.f32 0.0, %v879
    %v881 = vpop.f32.mrb[0].mxu0
    %v882 = vpop.f32.mrb[0].mxu0
    %883 = vdwg.mxu0
    %884 = vmatprep.subr.bf16.mxu0 %v552
    %885 = vmatpush1.bf16.msra.mxu0 %v551
    %886 = vmatprep.subr.bf16.mxu0 %v556
    %887 = vmatpush1.bf16.msra.mxu0 %v555
    %888 = vmatprep.subr.bf16.mxu0 %v560
    %889 = vmatpush1.bf16.msra.mxu0 %v559
    %890 = vmatprep.subr.bf16.mxu0 %v564
    %891 = vmatpush1.bf16.msra.mxu0 %v563
    %892 = vmatprep.subr.bf16.mxu0 %v568
    %893 = vmatpush1.bf16.msra.mxu0 %v567
    %894 = vmatprep.subr.bf16.mxu0 %v572
    %895 = vmatpush1.bf16.msra.mxu0 %v571
    %896 = vmatprep.subr.bf16.mxu0 %v576
    %897 = vmatpush1.bf16.msra.mxu0 %v575
    %898 = vmatprep.subr.bf16.mxu0 %v580
    %899 = vmatpush1.bf16.msra.mxu0 %v579
    %900 = vmatprep.subr.bf16.mxu0 0
    %901 = vmatpush1.bf16.msra.mxu0 0
    %902 = vmatprep.subr.bf16.mxu0 0
    %903 = vmatpush1.bf16.msra.mxu0 0
    %904 = vmatprep.subr.bf16.mxu0 0
    %905 = vmatpush1.bf16.msra.mxu0 0
    %906 = vmatprep.subr.bf16.mxu0 0
    %907 = vmatpush1.bf16.msra.mxu0 0
    %908 = vmatprep.subr.bf16.mxu0 0
    %909 = vmatpush1.bf16.msra.mxu0 0
    %910 = vmatprep.subr.bf16.mxu0 0
    %911 = vmatpush1.bf16.msra.mxu0 0
    %912 = vmatprep.subr.bf16.mxu0 0
    %913 = vmatpush1.bf16.msra.mxu0 0
    %914 = vmatprep.subr.bf16.mxu0 0
    %915 = vmatpush1.bf16.msra.mxu0 0
    %916 = vmatprep.mubr.bf16.mxu0 0
    %917 = vmatmul.mubr.bf16.gmra.mrb[0].mxu0 %v842
    %v918 = vpop.f32.mrb[0].mxu0
    %v919 = vadd.f32 0.0, %v918
    %v920 = vpop.f32.mrb[0].mxu0
    %v921 = vadd.f32 0.0, %v920
    %v922 = vpop.f32.mrb[0].mxu0
    %v923 = vpop.f32.mrb[0].mxu0
    %924 = vdwg.mxu0
    %v925 = vadd.f32 %v838, %v878
    %v926 = vadd.f32 %v839, %v880
    %v927 = vadd.f32 %v840, %v919
    %v928 = vadd.f32 %v841, %v921
    %v929 = vxor.u32 %v925, 2147483648
    %v930 = vmul.f32 %v929, 1.442695
    %v931 = vpow.pop %v930
    %v932 = vadd.f32 %v931, 1.0
    %v933 = vrcp.pop %v932
    %v934 = vmul.f32 1.0, %v933
    %v935 = vxor.u32 %v926, 2147483648
    %v936 = vmul.f32 %v935, 1.442695
    %v937 = vpow.pop %v936
    %v938 = vadd.f32 %v937, 1.0
    %v939 = vrcp.pop %v938
    %v940 = vmul.f32 1.0, %v939
    %v941 = vtanh.pop %v927
    %v942 = vxor.u32 %v928, 2147483648
    %v943 = vmul.f32 %v942, 1.442695
    %v944 = vpow.pop %v943
    %v945 = vadd.f32 %v944, 1.0
    %v946 = vrcp.pop %v945
    %v947 = vmul.f32 1.0, %v946
    %v948 = vmul.f32 %v940, %v835
    %v949 = vmul.f32 %v934, %v941
    %v950 = vadd.f32 %v948, %v949
    %v951 = vtanh.pop %v950
    %v952 = vmul.f32 %v947, %v951
    %v953 = vld [vmem:[#allocation2 + $0x60] sm:$0xff]
    %v954 = vld [vmem:[#allocation2 + $0x68] sm:$0xff]
    %v955 = vld [vmem:[#allocation2 + $0x70] sm:$0xff]
    %v956 = vld [vmem:[#allocation2 + $0x78] sm:$0xff]
    %v957 = vpack.c.bf16 %v952, %v952
    %958 = vmatprep.subr.bf16.mxu0 %v550
    %959 = vmatpush1.bf16.msra.mxu0 %v549
    %960 = vmatprep.subr.bf16.mxu0 %v554
    %961 = vmatpush1.bf16.msra.mxu0 %v553
    %962 = vmatprep.subr.bf16.mxu0 %v558
    %963 = vmatpush1.bf16.msra.mxu0 %v557
    %964 = vmatprep.subr.bf16.mxu0 %v562
    %965 = vmatpush1.bf16.msra.mxu0 %v561
    %966 = vmatprep.subr.bf16.mxu0 %v566
    %967 = vmatpush1.bf16.msra.mxu0 %v565
    %968 = vmatprep.subr.bf16.mxu0 %v570
    %969 = vmatpush1.bf16.msra.mxu0 %v569
    %970 = vmatprep.subr.bf16.mxu0 %v574
    %971 = vmatpush1.bf16.msra.mxu0 %v573
    %972 = vmatprep.subr.bf16.mxu0 %v578
    %973 = vmatpush1.bf16.msra.mxu0 %v577
    %974 = vmatprep.subr.bf16.mxu0 0
    %975 = vmatpush1.bf16.msra.mxu0 0
    %976 = vmatprep.subr.bf16.mxu0 0
    %977 = vmatpush1.bf16.msra.mxu0 0
    %978 = vmatprep.subr.bf16.mxu0 0
    %979 = vmatpush1.bf16.msra.mxu0 0
    %980 = vmatprep.subr.bf16.mxu0 0
    %981 = vmatpush1.bf16.msra.mxu0 0
    %982 = vmatprep.subr.bf16.mxu0 0
    %983 = vmatpush1.bf16.msra.mxu0 0
    %984 = vmatprep.subr.bf16.mxu0 0
    %985 = vmatpush1.bf16.msra.mxu0 0
    %986 = vmatprep.subr.bf16.mxu0 0
    %987 = vmatpush1.bf16.msra.mxu0 0
    %988 = vmatprep.subr.bf16.mxu0 0
    %989 = vmatpush1.bf16.msra.mxu0 0
    %990 = vmatprep.mubr.bf16.mxu0 0
    %991 = vmatmul.mubr.bf16.gmra.mrb[0].mxu0 %v957
    %v992 = vpop.f32.mrb[0].mxu0
    %v993 = vadd.f32 0.0, %v992
    %v994 = vpop.f32.mrb[0].mxu0
    %v995 = vadd.f32 0.0, %v994
    %v996 = vpop.f32.mrb[0].mxu0
    %v997 = vpop.f32.mrb[0].mxu0
    %998 = vdwg.mxu0
    %999 = vmatprep.subr.bf16.mxu0 %v552
    %1000 = vmatpush1.bf16.msra.mxu0 %v551
    %1001 = vmatprep.subr.bf16.mxu0 %v556
    %1002 = vmatpush1.bf16.msra.mxu0 %v555
    %1003 = vmatprep.subr.bf16.mxu0 %v560
    %1004 = vmatpush1.bf16.msra.mxu0 %v559
    %1005 = vmatprep.subr.bf16.mxu0 %v564
    %1006 = vmatpush1.bf16.msra.mxu0 %v563
    %1007 = vmatprep.subr.bf16.mxu0 %v568
    %1008 = vmatpush1.bf16.msra.mxu0 %v567
    %1009 = vmatprep.subr.bf16.mxu0 %v572
    %1010 = vmatpush1.bf16.msra.mxu0 %v571
    %1011 = vmatprep.subr.bf16.mxu0 %v576
    %1012 = vmatpush1.bf16.msra.mxu0 %v575
    %1013 = vmatprep.subr.bf16.mxu0 %v580
    %1014 = vmatpush1.bf16.msra.mxu0 %v579
    %1015 = vmatprep.subr.bf16.mxu0 0
    %1016 = vmatpush1.bf16.msra.mxu0 0
    %1017 = vmatprep.subr.bf16.mxu0 0
    %1018 = vmatpush1.bf16.msra.mxu0 0
    %1019 = vmatprep.subr.bf16.mxu0 0
    %1020 = vmatpush1.bf16.msra.mxu0 0
    %1021 = vmatprep.subr.bf16.mxu0 0
    %1022 = vmatpush1.bf16.msra.mxu0 0
    %1023 = vmatprep.subr.bf16.mxu0 0
    %1024 = vmatpush1.bf16.msra.mxu0 0
    %1025 = vmatprep.subr.bf16.mxu0 0
    %1026 = vmatpush1.bf16.msra.mxu0 0
    %1027 = vmatprep.subr.bf16.mxu0 0
    %1028 = vmatpush1.bf16.msra.mxu0 0
    %1029 = vmatprep.subr.bf16.mxu0 0
    %1030 = vmatpush1.bf16.msra.mxu0 0
    %1031 = vmatprep.mubr.bf16.mxu0 0
    %1032 = vmatmul.mubr.bf16.gmra.mrb[0].mxu0 %v957
    %v1033 = vpop.f32.mrb[0].mxu0
    %v1034 = vadd.f32 0.0, %v1033
    %v1035 = vpop.f32.mrb[0].mxu0
    %v1036 = vadd.f32 0.0, %v1035
    %v1037 = vpop.f32.mrb[0].mxu0
    %v1038 = vpop.f32.mrb[0].mxu0
    %1039 = vdwg.mxu0
    %v1040 = vadd.f32 %v953, %v993
    %v1041 = vadd.f32 %v954, %v995
    %v1042 = vadd.f32 %v955, %v1034
    %v1043 = vadd.f32 %v956, %v1036
    %v1044 = vxor.u32 %v1040, 2147483648
    %v1045 = vmul.f32 %v1044, 1.442695
    %v1046 = vpow.pop %v1045
    %v1047 = vadd.f32 %v1046, 1.0
    %v1048 = vrcp.pop %v1047
    %v1049 = vmul.f32 1.0, %v1048
    %v1050 = vxor.u32 %v1041, 2147483648
    %v1051 = vmul.f32 %v1050, 1.442695
    %v1052 = vpow.pop %v1051
    %v1053 = vadd.f32 %v1052, 1.0
    %v1054 = vrcp.pop %v1053
    %v1055 = vmul.f32 1.0, %v1054
    %v1056 = vtanh.pop %v1042
    %v1057 = vxor.u32 %v1043, 2147483648
    %v1058 = vmul.f32 %v1057, 1.442695
    %v1059 = vpow.pop %v1058
    %v1060 = vadd.f32 %v1059, 1.0
    %v1061 = vrcp.pop %v1060
    %v1062 = vmul.f32 1.0, %v1061
    %v1063 = vmul.f32 %v1055, %v950
    %v1064 = vmul.f32 %v1049, %v1056
    %v1065 = vadd.f32 %v1063, %v1064
    %v1066 = vtanh.pop %v1065
    %v1067 = vmul.f32 %v1062, %v1066
    %v1068 = vld [vmem:[#allocation2 + $0x80] sm:$0xff]
    %v1069 = vld [vmem:[#allocation2 + $0x88] sm:$0xff]
    %v1070 = vld [vmem:[#allocation2 + $0x90] sm:$0xff]
    %v1071 = vld [vmem:[#allocation2 + $0x98] sm:$0xff]
    %v1072 = vpack.c.bf16 %v1067, %v1067
    %1073 = vmatprep.subr.bf16.mxu0 %v550
    %1074 = vmatpush1.bf16.msra.mxu0 %v549
    %1075 = vmatprep.subr.bf16.mxu0 %v554
    %1076 = vmatpush1.bf16.msra.mxu0 %v553
    %1077 = vmatprep.subr.bf16.mxu0 %v558
    %1078 = vmatpush1.bf16.msra.mxu0 %v557
    %1079 = vmatprep.subr.bf16.mxu0 %v562
    %1080 = vmatpush1.bf16.msra.mxu0 %v561
    %1081 = vmatprep.subr.bf16.mxu0 %v566
    %1082 = vmatpush1.bf16.msra.mxu0 %v565
    %1083 = vmatprep.subr.bf16.mxu0 %v570
    %1084 = vmatpush1.bf16.msra.mxu0 %v569
    %1085 = vmatprep.subr.bf16.mxu0 %v574
    %1086 = vmatpush1.bf16.msra.mxu0 %v573
    %1087 = vmatprep.subr.bf16.mxu0 %v578
    %1088 = vmatpush1.bf16.msra.mxu0 %v577
    %1089 = vmatprep.subr.bf16.mxu0 0
    %1090 = vmatpush1.bf16.msra.mxu0 0
    %1091 = vmatprep.subr.bf16.mxu0 0
    %1092 = vmatpush1.bf16.msra.mxu0 0
    %1093 = vmatprep.subr.bf16.mxu0 0
    %1094 = vmatpush1.bf16.msra.mxu0 0
    %1095 = vmatprep.subr.bf16.mxu0 0
    %1096 = vmatpush1.bf16.msra.mxu0 0
    %1097 = vmatprep.subr.bf16.mxu0 0
    %1098 = vmatpush1.bf16.msra.mxu0 0
    %1099 = vmatprep.subr.bf16.mxu0 0
    %1100 = vmatpush1.bf16.msra.mxu0 0
    %1101 = vmatprep.subr.bf16.mxu0 0
    %1102 = vmatpush1.bf16.msra.mxu0 0
    %1103 = vmatprep.subr.bf16.mxu0 0
    %1104 = vmatpush1.bf16.msra.mxu0 0
    %1105 = vmatprep.mubr.bf16.mxu0 0
    %1106 = vmatmul.mubr.bf16.gmra.mrb[0].mxu0 %v1072
    %v1107 = vpop.f32.mrb[0].mxu0
    %v1108 = vadd.f32 0.0, %v1107
    %v1109 = vpop.f32.mrb[0].mxu0
    %v1110 = vadd.f32 0.0, %v1109
    %v1111 = vpop.f32.mrb[0].mxu0
    %v1112 = vpop.f32.mrb[0].mxu0
    %1113 = vdwg.mxu0
    %1114 = vmatprep.subr.bf16.mxu0 %v552
    %1115 = vmatpush1.bf16.msra.mxu0 %v551
    %1116 = vmatprep.subr.bf16.mxu0 %v556
    %1117 = vmatpush1.bf16.msra.mxu0 %v555
    %1118 = vmatprep.subr.bf16.mxu0 %v560
    %1119 = vmatpush1.bf16.msra.mxu0 %v559
    %1120 = vmatprep.subr.bf16.mxu0 %v564
    %1121 = vmatpush1.bf16.msra.mxu0 %v563
    %1122 = vmatprep.subr.bf16.mxu0 %v568
    %1123 = vmatpush1.bf16.msra.mxu0 %v567
    %1124 = vmatprep.subr.bf16.mxu0 %v572
    %1125 = vmatpush1.bf16.msra.mxu0 %v571
    %1126 = vmatprep.subr.bf16.mxu0 %v576
    %1127 = vmatpush1.bf16.msra.mxu0 %v575
    %1128 = vmatprep.subr.bf16.mxu0 %v580
    %1129 = vmatpush1.bf16.msra.mxu0 %v579
    %1130 = vmatprep.subr.bf16.mxu0 0
    %1131 = vmatpush1.bf16.msra.mxu0 0
    %1132 = vmatprep.subr.bf16.mxu0 0
    %1133 = vmatpush1.bf16.msra.mxu0 0
    %1134 = vmatprep.subr.bf16.mxu0 0
    %1135 = vmatpush1.bf16.msra.mxu0 0
    %1136 = vmatprep.subr.bf16.mxu0 0
    %1137 = vmatpush1.bf16.msra.mxu0 0
    %1138 = vmatprep.subr.bf16.mxu0 0
    %1139 = vmatpush1.bf16.msra.mxu0 0
    %1140 = vmatprep.subr.bf16.mxu0 0
    %1141 = vmatpush1.bf16.msra.mxu0 0
    %1142 = vmatprep.subr.bf16.mxu0 0
    %1143 = vmatpush1.bf16.msra.mxu0 0
    %1144 = vmatprep.subr.bf16.mxu0 0
    %1145 = vmatpush1.bf16.msra.mxu0 0
    %1146 = vmatprep.mubr.bf16.mxu0 0
    %1147 = vmatmul.mubr.bf16.gmra.mrb[0].mxu0 %v1072
    %v1148 = vpop.f32.mrb[0].mxu0
    %v1149 = vadd.f32 0.0, %v1148
    %v1150 = vpop.f32.mrb[0].mxu0
    %v1151 = vadd.f32 0.0, %v1150
    %v1152 = vpop.f32.mrb[0].mxu0
    %v1153 = vpop.f32.mrb[0].mxu0
    %1154 = vdwg.mxu0
    %v1155 = vadd.f32 %v1068, %v1108
    %v1156 = vadd.f32 %v1069, %v1110
    %v1157 = vadd.f32 %v1070, %v1149
    %v1158 = vadd.f32 %v1071, %v1151
    %v1159 = vxor.u32 %v1155, 2147483648
    %v1160 = vmul.f32 %v1159, 1.442695
    %v1161 = vpow.pop %v1160
    %v1162 = vadd.f32 %v1161, 1.0
    %v1163 = vrcp.pop %v1162
    %v1164 = vmul.f32 1.0, %v1163
    %v1165 = vxor.u32 %v1156, 2147483648
    %v1166 = vmul.f32 %v1165, 1.442695
    %v1167 = vpow.pop %v1166
    %v1168 = vadd.f32 %v1167, 1.0
    %v1169 = vrcp.pop %v1168
    %v1170 = vmul.f32 1.0, %v1169
    %v1171 = vtanh.pop %v1157
    %v1172 = vxor.u32 %v1158, 2147483648
    %v1173 = vmul.f32 %v1172, 1.442695
    %v1174 = vpow.pop %v1173
    %v1175 = vadd.f32 %v1174, 1.0
    %v1176 = vrcp.pop %v1175
    %v1177 = vmul.f32 1.0, %v1176
    %v1178 = vmul.f32 %v1170, %v1065
    %v1179 = vmul.f32 %v1164, %v1171
    %v1180 = vadd.f32 %v1178, %v1179
    %v1181 = vtanh.pop %v1180
    %v1182 = vmul.f32 %v1177, %v1181
    %v1183 = vld [vmem:[#allocation2 + $0xa0] sm:$0xff]
    %v1184 = vld [vmem:[#allocation2 + $0xa8] sm:$0xff]
    %v1185 = vld [vmem:[#allocation2 + $0xb0] sm:$0xff]
    %v1186 = vld [vmem:[#allocation2 + $0xb8] sm:$0xff]
    %v1187 = vpack.c.bf16 %v1182, %v1182
    %1188 = vmatprep.subr.bf16.mxu0 %v550
    %1189 = vmatpush1.bf16.msra.mxu0 %v549
    %1190 = vmatprep.subr.bf16.mxu0 %v554
    %1191 = vmatpush1.bf16.msra.mxu0 %v553
    %1192 = vmatprep.subr.bf16.mxu0 %v558
    %1193 = vmatpush1.bf16.msra.mxu0 %v557
    %1194 = vmatprep.subr.bf16.mxu0 %v562
    %1195 = vmatpush1.bf16.msra.mxu0 %v561
    %1196 = vmatprep.subr.bf16.mxu0 %v566
    %1197 = vmatpush1.bf16.msra.mxu0 %v565
    %1198 = vmatprep.subr.bf16.mxu0 %v570
    %1199 = vmatpush1.bf16.msra.mxu0 %v569
    %1200 = vmatprep.subr.bf16.mxu0 %v574
    %1201 = vmatpush1.bf16.msra.mxu0 %v573
    %1202 = vmatprep.subr.bf16.mxu0 %v578
    %1203 = vmatpush1.bf16.msra.mxu0 %v577
    %1204 = vmatprep.subr.bf16.mxu0 0
    %1205 = vmatpush1.bf16.msra.mxu0 0
    %1206 = vmatprep.subr.bf16.mxu0 0
    %1207 = vmatpush1.bf16.msra.mxu0 0
    %1208 = vmatprep.subr.bf16.mxu0 0
    %1209 = vmatpush1.bf16.msra.mxu0 0
    %1210 = vmatprep.subr.bf16.mxu0 0
    %1211 = vmatpush1.bf16.msra.mxu0 0
    %1212 = vmatprep.subr.bf16.mxu0 0
    %1213 = vmatpush1.bf16.msra.mxu0 0
    %1214 = vmatprep.subr.bf16.mxu0 0
    %1215 = vmatpush1.bf16.msra.mxu0 0
    %1216 = vmatprep.subr.bf16.mxu0 0
    %1217 = vmatpush1.bf16.msra.mxu0 0
    %1218 = vmatprep.subr.bf16.mxu0 0
    %1219 = vmatpush1.bf16.msra.mxu0 0
    %1220 = vmatprep.mubr.bf16.mxu0 0
    %1221 = vmatmul.mubr.bf16.gmra.mrb[0].mxu0 %v1187
    %v1222 = vpop.f32.mrb[0].mxu0
    %v1223 = vadd.f32 0.0, %v1222
    %v1224 = vpop.f32.mrb[0].mxu0
    %v1225 = vadd.f32 0.0, %v1224
    %v1226 = vpop.f32.mrb[0].mxu0
    %v1227 = vpop.f32.mrb[0].mxu0
    %1228 = vdwg.mxu0
    %1229 = vmatprep.subr.bf16.mxu0 %v552
    %1230 = vmatpush1.bf16.msra.mxu0 %v551
    %1231 = vmatprep.subr.bf16.mxu0 %v556
    %1232 = vmatpush1.bf16.msra.mxu0 %v555
    %1233 = vmatprep.subr.bf16.mxu0 %v560
    %1234 = vmatpush1.bf16.msra.mxu0 %v559
    %1235 = vmatprep.subr.bf16.mxu0 %v564
    %1236 = vmatpush1.bf16.msra.mxu0 %v563
    %1237 = vmatprep.subr.bf16.mxu0 %v568
    %1238 = vmatpush1.bf16.msra.mxu0 %v567
    %1239 = vmatprep.subr.bf16.mxu0 %v572
    %1240 = vmatpush1.bf16.msra.mxu0 %v571
    %1241 = vmatprep.subr.bf16.mxu0 %v576
    %1242 = vmatpush1.bf16.msra.mxu0 %v575
    %1243 = vmatprep.subr.bf16.mxu0 %v580
    %1244 = vmatpush1.bf16.msra.mxu0 %v579
    %1245 = vmatprep.subr.bf16.mxu0 0
    %1246 = vmatpush1.bf16.msra.mxu0 0
    %1247 = vmatprep.subr.bf16.mxu0 0
    %1248 = vmatpush1.bf16.msra.mxu0 0
    %1249 = vmatprep.subr.bf16.mxu0 0
    %1250 = vmatpush1.bf16.msra.mxu0 0
    %1251 = vmatprep.subr.bf16.mxu0 0
    %1252 = vmatpush1.bf16.msra.mxu0 0
    %1253 = vmatprep.subr.bf16.mxu0 0
    %1254 = vmatpush1.bf16.msra.mxu0 0
    %1255 = vmatprep.subr.bf16.mxu0 0
    %1256 = vmatpush1.bf16.msra.mxu0 0
    %1257 = vmatprep.subr.bf16.mxu0 0
    %1258 = vmatpush1.bf16.msra.mxu0 0
    %1259 = vmatprep.subr.bf16.mxu0 0
    %1260 = vmatpush1.bf16.msra.mxu0 0
    %1261 = vmatprep.mubr.bf16.mxu0 0
    %1262 = vmatmul.mubr.bf16.gmra.mrb[0].mxu0 %v1187
    %v1263 = vpop.f32.mrb[0].mxu0
    %v1264 = vadd.f32 0.0, %v1263
    %v1265 = vpop.f32.mrb[0].mxu0
    %v1266 = vadd.f32 0.0, %v1265
    %v1267 = vpop.f32.mrb[0].mxu0
    %v1268 = vpop.f32.mrb[0].mxu0
    %1269 = vdwg.mxu0
    %v1270 = vadd.f32 %v1183, %v1223
    %v1271 = vadd.f32 %v1184, %v1225
    %v1272 = vadd.f32 %v1185, %v1264
    %v1273 = vadd.f32 %v1186, %v1266
    %v1274 = vxor.u32 %v1270, 2147483648
    %v1275 = vmul.f32 %v1274, 1.442695
    %v1276 = vpow.pop %v1275
    %v1277 = vadd.f32 %v1276, 1.0
    %v1278 = vrcp.pop %v1277
    %v1279 = vmul.f32 1.0, %v1278
    %v1280 = vxor.u32 %v1271, 2147483648
    %v1281 = vmul.f32 %v1280, 1.442695
    %v1282 = vpow.pop %v1281
    %v1283 = vadd.f32 %v1282, 1.0
    %v1284 = vrcp.pop %v1283
    %v1285 = vmul.f32 1.0, %v1284
    %v1286 = vtanh.pop %v1272
    %v1287 = vxor.u32 %v1273, 2147483648
    %v1288 = vmul.f32 %v1287, 1.442695
    %v1289 = vpow.pop %v1288
    %v1290 = vadd.f32 %v1289, 1.0
    %v1291 = vrcp.pop %v1290
    %v1292 = vmul.f32 1.0, %v1291
    %v1293 = vmul.f32 %v1285, %v1180
    %v1294 = vmul.f32 %v1279, %v1286
    %v1295 = vadd.f32 %v1293, %v1294
    %v1296 = vtanh.pop %v1295
    %v1297 = vmul.f32 %v1292, %v1296
    %v1298 = vld [vmem:[#allocation2 + $0xc0] sm:$0xff]
    %v1299 = vld [vmem:[#allocation2 + $0xc8] sm:$0xff]
    %v1300 = vld [vmem:[#allocation2 + $0xd0] sm:$0xff]
    %v1301 = vld [vmem:[#allocation2 + $0xd8] sm:$0xff]
    %v1302 = vpack.c.bf16 %v1297, %v1297
    %1303 = vmatprep.subr.bf16.mxu0 %v550
    %1304 = vmatpush1.bf16.msra.mxu0 %v549
    %1305 = vmatprep.subr.bf16.mxu0 %v554
    %1306 = vmatpush1.bf16.msra.mxu0 %v553
    %1307 = vmatprep.subr.bf16.mxu0 %v558
    %1308 = vmatpush1.bf16.msra.mxu0 %v557
    %1309 = vmatprep.subr.bf16.mxu0 %v562
    %1310 = vmatpush1.bf16.msra.mxu0 %v561
    %1311 = vmatprep.subr.bf16.mxu0 %v566
    %1312 = vmatpush1.bf16.msra.mxu0 %v565
    %1313 = vmatprep.subr.bf16.mxu0 %v570
    %1314 = vmatpush1.bf16.msra.mxu0 %v569
    %1315 = vmatprep.subr.bf16.mxu0 %v574
    %1316 = vmatpush1.bf16.msra.mxu0 %v573
    %1317 = vmatprep.subr.bf16.mxu0 %v578
    %1318 = vmatpush1.bf16.msra.mxu0 %v577
    %1319 = vmatprep.subr.bf16.mxu0 0
    %1320 = vmatpush1.bf16.msra.mxu0 0
    %1321 = vmatprep.subr.bf16.mxu0 0
    %1322 = vmatpush1.bf16.msra.mxu0 0
    %1323 = vmatprep.subr.bf16.mxu0 0
    %1324 = vmatpush1.bf16.msra.mxu0 0
    %1325 = vmatprep.subr.bf16.mxu0 0
    %1326 = vmatpush1.bf16.msra.mxu0 0
    %1327 = vmatprep.subr.bf16.mxu0 0
    %1328 = vmatpush1.bf16.msra.mxu0 0
    %1329 = vmatprep.subr.bf16.mxu0 0
    %1330 = vmatpush1.bf16.msra.mxu0 0
    %1331 = vmatprep.subr.bf16.mxu0 0
    %1332 = vmatpush1.bf16.msra.mxu0 0
    %1333 = vmatprep.subr.bf16.mxu0 0
    %1334 = vmatpush1.bf16.msra.mxu0 0
    %1335 = vmatprep.mubr.bf16.mxu0 0
    %1336 = vmatmul.mubr.bf16.gmra.mrb[0].mxu0 %v1302
    %v1337 = vpop.f32.mrb[0].mxu0
    %v1338 = vadd.f32 0.0, %v1337
    %v1339 = vpop.f32.mrb[0].mxu0
    %v1340 = vadd.f32 0.0, %v1339
    %v1341 = vpop.f32.mrb[0].mxu0
    %v1342 = vpop.f32.mrb[0].mxu0
    %1343 = vdwg.mxu0
    %1344 = vmatprep.subr.bf16.mxu0 %v552
    %1345 = vmatpush1.bf16.msra.mxu0 %v551
    %1346 = vmatprep.subr.bf16.mxu0 %v556
    %1347 = vmatpush1.bf16.msra.mxu0 %v555
    %1348 = vmatprep.subr.bf16.mxu0 %v560
    %1349 = vmatpush1.bf16.msra.mxu0 %v559
    %1350 = vmatprep.subr.bf16.mxu0 %v564
    %1351 = vmatpush1.bf16.msra.mxu0 %v563
    %1352 = vmatprep.subr.bf16.mxu0 %v568
    %1353 = vmatpush1.bf16.msra.mxu0 %v567
    %1354 = vmatprep.subr.bf16.mxu0 %v572
    %1355 = vmatpush1.bf16.msra.mxu0 %v571
    %1356 = vmatprep.subr.bf16.mxu0 %v576
    %1357 = vmatpush1.bf16.msra.mxu0 %v575
    %1358 = vmatprep.subr.bf16.mxu0 %v580
    %1359 = vmatpush1.bf16.msra.mxu0 %v579
    %1360 = vmatprep.subr.bf16.mxu0 0
    %1361 = vmatpush1.bf16.msra.mxu0 0
    %1362 = vmatprep.subr.bf16.mxu0 0
    %1363 = vmatpush1.bf16.msra.mxu0 0
    %1364 = vmatprep.subr.bf16.mxu0 0
    %1365 = vmatpush1.bf16.msra.mxu0 0
    %1366 = vmatprep.subr.bf16.mxu0 0
    %1367 = vmatpush1.bf16.msra.mxu0 0
    %1368 = vmatprep.subr.bf16.mxu0 0
    %1369 = vmatpush1.bf16.msra.mxu0 0
    %1370 = vmatprep.subr.bf16.mxu0 0
    %1371 = vmatpush1.bf16.msra.mxu0 0
    %1372 = vmatprep.subr.bf16.mxu0 0
    %1373 = vmatpush1.bf16.msra.mxu0 0
    %1374 = vmatprep.subr.bf16.mxu0 0
    %1375 = vmatpush1.bf16.msra.mxu0 0
    %1376 = vmatprep.mubr.bf16.mxu0 0
    %1377 = vmatmul.mubr.bf16.gmra.mrb[0].mxu0 %v1302
    %v1378 = vpop.f32.mrb[0].mxu0
    %v1379 = vadd.f32 0.0, %v1378
    %v1380 = vpop.f32.mrb[0].mxu0
    %v1381 = vadd.f32 0.0, %v1380
    %v1382 = vpop.f32.mrb[0].mxu0
    %v1383 = vpop.f32.mrb[0].mxu0
    %1384 = vdwg.mxu0
    %v1385 = vadd.f32 %v1298, %v1338
    %v1386 = vadd.f32 %v1299, %v1340
    %v1387 = vadd.f32 %v1300, %v1379
    %v1388 = vadd.f32 %v1301, %v1381
    %v1389 = vxor.u32 %v1385, 2147483648
    %v1390 = vmul.f32 %v1389, 1.442695
    %v1391 = vpow.pop %v1390
    %v1392 = vadd.f32 %v1391, 1.0
    %v1393 = vrcp.pop %v1392
    %v1394 = vmul.f32 1.0, %v1393
    %v1395 = vxor.u32 %v1386, 2147483648
    %v1396 = vmul.f32 %v1395, 1.442695
    %v1397 = vpow.pop %v1396
    %v1398 = vadd.f32 %v1397, 1.0
    %v1399 = vrcp.pop %v1398
    %v1400 = vmul.f32 1.0, %v1399
    %v1401 = vtanh.pop %v1387
    %v1402 = vxor.u32 %v1388, 2147483648
    %v1403 = vmul.f32 %v1402, 1.442695
    %v1404 = vpow.pop %v1403
    %v1405 = vadd.f32 %v1404, 1.0
    %v1406 = vrcp.pop %v1405
    %v1407 = vmul.f32 1.0, %v1406
    %v1408 = vmul.f32 %v1400, %v1295
    %v1409 = vmul.f32 %v1394, %v1401
    %v1410 = vadd.f32 %v1408, %v1409
    %v1411 = vtanh.pop %v1410
    %v1412 = vmul.f32 %v1407, %v1411
    %v1413 = vld [vmem:[#allocation2 + $0xe0] sm:$0xff]
    %v1414 = vld [vmem:[#allocation2 + $0xe8] sm:$0xff]
    %v1415 = vld [vmem:[#allocation2 + $0xf0] sm:$0xff]
    %v1416 = vld [vmem:[#allocation2 + $0xf8] sm:$0xff]
    %v1417 = vpack.c.bf16 %v1412, %v1412
    %1418 = vmatprep.subr.bf16.mxu0 %v550
    %1419 = vmatpush1.bf16.msra.mxu0 %v549
    %1420 = vmatprep.subr.bf16.mxu0 %v554
    %1421 = vmatpush1.bf16.msra.mxu0 %v553
    %1422 = vmatprep.subr.bf16.mxu0 %v558
    %1423 = vmatpush1.bf16.msra.mxu0 %v557
    %1424 = vmatprep.subr.bf16.mxu0 %v562
    %1425 = vmatpush1.bf16.msra.mxu0 %v561
    %1426 = vmatprep.subr.bf16.mxu0 %v566
    %1427 = vmatpush1.bf16.msra.mxu0 %v565
    %1428 = vmatprep.subr.bf16.mxu0 %v570
    %1429 = vmatpush1.bf16.msra.mxu0 %v569
    %1430 = vmatprep.subr.bf16.mxu0 %v574
    %1431 = vmatpush1.bf16.msra.mxu0 %v573
    %1432 = vmatprep.subr.bf16.mxu0 %v578
    %1433 = vmatpush1.bf16.msra.mxu0 %v577
    %1434 = vmatprep.subr.bf16.mxu0 0
    %1435 = vmatpush1.bf16.msra.mxu0 0
    %1436 = vmatprep.subr.bf16.mxu0 0
    %1437 = vmatpush1.bf16.msra.mxu0 0
    %1438 = vmatprep.subr.bf16.mxu0 0
    %1439 = vmatpush1.bf16.msra.mxu0 0
    %1440 = vmatprep.subr.bf16.mxu0 0
    %1441 = vmatpush1.bf16.msra.mxu0 0
    %1442 = vmatprep.subr.bf16.mxu0 0
    %1443 = vmatpush1.bf16.msra.mxu0 0
    %1444 = vmatprep.subr.bf16.mxu0 0
    %1445 = vmatpush1.bf16.msra.mxu0 0
    %1446 = vmatprep.subr.bf16.mxu0 0
    %1447 = vmatpush1.bf16.msra.mxu0 0
    %1448 = vmatprep.subr.bf16.mxu0 0
    %1449 = vmatpush1.bf16.msra.mxu0 0
    %1450 = vmatprep.mubr.bf16.mxu0 0
    %1451 = vmatmul.mubr.bf16.gmra.mrb[0].mxu0 %v1417
    %v1452 = vpop.f32.mrb[0].mxu0
    %v1453 = vadd.f32 0.0, %v1452
    %v1454 = vpop.f32.mrb[0].mxu0
    %v1455 = vadd.f32 0.0, %v1454
    %v1456 = vpop.f32.mrb[0].mxu0
    %v1457 = vpop.f32.mrb[0].mxu0
    %1458 = vdwg.mxu0
    %1459 = vmatprep.subr.bf16.mxu0 %v552
    %1460 = vmatpush1.bf16.msra.mxu0 %v551
    %1461 = vmatprep.subr.bf16.mxu0 %v556
    %1462 = vmatpush1.bf16.msra.mxu0 %v555
    %1463 = vmatprep.subr.bf16.mxu0 %v560
    %1464 = vmatpush1.bf16.msra.mxu0 %v559
    %1465 = vmatprep.subr.bf16.mxu0 %v564
    %1466 = vmatpush1.bf16.msra.mxu0 %v563
    %1467 = vmatprep.subr.bf16.mxu0 %v568
    %1468 = vmatpush1.bf16.msra.mxu0 %v567
    %1469 = vmatprep.subr.bf16.mxu0 %v572
    %1470 = vmatpush1.bf16.msra.mxu0 %v571
    %1471 = vmatprep.subr.bf16.mxu0 %v576
    %1472 = vmatpush1.bf16.msra.mxu0 %v575
    %1473 = vmatprep.subr.bf16.mxu0 %v580
    %1474 = vmatpush1.bf16.msra.mxu0 %v579
    %1475 = vmatprep.subr.bf16.mxu0 0
    %1476 = vmatpush1.bf16.msra.mxu0 0
    %1477 = vmatprep.subr.bf16.mxu0 0
    %1478 = vmatpush1.bf16.msra.mxu0 0
    %1479 = vmatprep.subr.bf16.mxu0 0
    %1480 = vmatpush1.bf16.msra.mxu0 0
    %1481 = vmatprep.subr.bf16.mxu0 0
    %1482 = vmatpush1.bf16.msra.mxu0 0
    %1483 = vmatprep.subr.bf16.mxu0 0
    %1484 = vmatpush1.bf16.msra.mxu0 0
    %1485 = vmatprep.subr.bf16.mxu0 0
    %1486 = vmatpush1.bf16.msra.mxu0 0
    %1487 = vmatprep.subr.bf16.mxu0 0
    %1488 = vmatpush1.bf16.msra.mxu0 0
    %1489 = vmatprep.subr.bf16.mxu0 0
    %1490 = vmatpush1.bf16.msra.mxu0 0
    %1491 = vmatprep.mubr.bf16.mxu0 0
    %1492 = vmatmul.mubr.bf16.gmra.mrb[0].mxu0 %v1417
    %v1493 = vpop.f32.mrb[0].mxu0
    %v1494 = vadd.f32 0.0, %v1493
    %v1495 = vpop.f32.mrb[0].mxu0
    %v1496 = vadd.f32 0.0, %v1495
    %v1497 = vpop.f32.mrb[0].mxu0
    %v1498 = vpop.f32.mrb[0].mxu0
    %1499 = vdwg.mxu0
    %v1500 = vadd.f32 %v1413, %v1453
    %v1501 = vadd.f32 %v1414, %v1455
    %v1502 = vadd.f32 %v1415, %v1494
    %v1503 = vadd.f32 %v1416, %v1496
    %v1504 = vxor.u32 %v1500, 2147483648
    %v1505 = vmul.f32 %v1504, 1.442695
    %v1506 = vpow.pop %v1505
    %v1507 = vadd.f32 %v1506, 1.0
    %v1508 = vrcp.pop %v1507
    %v1509 = vmul.f32 1.0, %v1508
    %v1510 = vxor.u32 %v1501, 2147483648
    %v1511 = vmul.f32 %v1510, 1.442695
    %v1512 = vpow.pop %v1511
    %v1513 = vadd.f32 %v1512, 1.0
    %v1514 = vrcp.pop %v1513
    %v1515 = vmul.f32 1.0, %v1514
    %v1516 = vtanh.pop %v1502
    %v1517 = vxor.u32 %v1503, 2147483648
    %v1518 = vmul.f32 %v1517, 1.442695
    %v1519 = vpow.pop %v1518
    %v1520 = vadd.f32 %v1519, 1.0
    %v1521 = vrcp.pop %v1520
    %v1522 = vmul.f32 1.0, %v1521
    %v1523 = vmul.f32 %v1515, %v1410
    %v1524 = vmul.f32 %v1509, %v1516
    %v1525 = vadd.f32 %v1523, %v1524
    %v1526 = vtanh.pop %v1525
    %v1527 = vmul.f32 %v1522, %v1526
    %v1528 = vpack.c.bf16 %v1527, %v1527
    %v1529 = vld [vmem:[#allocation9] sm:$0xf]
    %v1530 = vld [vmem:[#allocation9 + $0x4] sm:$0xf]
    %v1531 = vld [vmem:[#allocation9 + $0x8] sm:$0xf]
    %v1532 = vld [vmem:[#allocation9 + $0xc] sm:$0xf]
    %v1533 = vld [vmem:[#allocation9 + $0x10] sm:$0xf]
    %v1534 = vld [vmem:[#allocation9 + $0x14] sm:$0xf]
    %v1535 = vld [vmem:[#allocation9 + $0x18] sm:$0xf]
    %v1536 = vld [vmem:[#allocation9 + $0x1c] sm:$0xf]
    %v1537 = vld [vmem:[#allocation9 + $0x20] sm:$0xf]
    %v1538 = vld [vmem:[#allocation9 + $0x24] sm:$0xf]
    %v1539 = vld [vmem:[#allocation9 + $0x28] sm:$0xf]
    %v1540 = vld [vmem:[#allocation9 + $0x2c] sm:$0xf]
    %v1541 = vld [vmem:[#allocation9 + $0x30] sm:$0xf]
    %v1542 = vld [vmem:[#allocation9 + $0x34] sm:$0xf]
    %v1543 = vld [vmem:[#allocation9 + $0x38] sm:$0xf]
    %v1544 = vld [vmem:[#allocation9 + $0x3c] sm:$0xf]
    %v1545 = vld [vmem:[%s5] sm:$0x1]
    %v1547 = vlaneseq
    %v1548 = vshrl.u32 %v1547, 7
    %v1549 = vsub.s32 0, %v1548
    %v1550 = vrot.slane %v1545, %v1549
    %v1568 = vunpack.c.l.b16 %v1529
    %v1569 = vunpack.c.l.b16 %v1530
    %v1570 = vunpack.c.l.b16 %v1531
    %v1571 = vunpack.c.l.b16 %v1532
    %v1572 = vunpack.c.l.b16 %v1533
    %v1573 = vunpack.c.l.b16 %v1534
    %v1574 = vunpack.c.l.b16 %v1535
    %v1575 = vunpack.c.l.b16 %v1536
    %v1576 = vunpack.c.l.b16 %v1537
    %v1577 = vunpack.c.l.b16 %v1538
    %v1578 = vunpack.c.l.b16 %v1539
    %v1579 = vunpack.c.l.b16 %v1540
    %v1580 = vunpack.c.l.b16 %v1541
    %v1581 = vunpack.c.l.b16 %v1542
    %v1582 = vunpack.c.l.b16 %v1543
    %v1583 = vunpack.c.l.b16 %v1544
    %v1584 = vpack.c.b16 %v1569, %v1568
    %v1585 = vpack.c.b16 %v1571, %v1570
    %v1586 = vpack.c.b16 %v1573, %v1572
    %v1587 = vpack.c.b16 %v1575, %v1574
    %v1588 = vpack.c.b16 %v1577, %v1576
    %v1589 = vpack.c.b16 %v1579, %v1578
    %v1590 = vpack.c.b16 %v1581, %v1580
    %v1591 = vpack.c.b16 %v1583, %v1582
    %1600 = vmatprep.subr.bf16.mxu0 0
    %1601 = vmatpush1.bf16.msra.mxu0 %v1584
    %1602 = vmatprep.subr.bf16.mxu0 0
    %1603 = vmatpush1.bf16.msra.mxu0 %v1585
    %1604 = vmatprep.subr.bf16.mxu0 0
    %1605 = vmatpush1.bf16.msra.mxu0 %v1586
    %1606 = vmatprep.subr.bf16.mxu0 0
    %1607 = vmatpush1.bf16.msra.mxu0 %v1587
    %1608 = vmatprep.subr.bf16.mxu0 0
    %1609 = vmatpush1.bf16.msra.mxu0 %v1588
    %1610 = vmatprep.subr.bf16.mxu0 0
    %1611 = vmatpush1.bf16.msra.mxu0 %v1589
    %1612 = vmatprep.subr.bf16.mxu0 0
    %1613 = vmatpush1.bf16.msra.mxu0 %v1590
    %1614 = vmatprep.subr.bf16.mxu0 0
    %1615 = vmatpush1.bf16.msra.mxu0 %v1591
    %1616 = vmatprep.subr.bf16.mxu0 0
    %1617 = vmatpush1.bf16.msra.mxu0 0
    %1618 = vmatprep.subr.bf16.mxu0 0
    %1619 = vmatpush1.bf16.msra.mxu0 0
    %1620 = vmatprep.subr.bf16.mxu0 0
    %1621 = vmatpush1.bf16.msra.mxu0 0
    %1622 = vmatprep.subr.bf16.mxu0 0
    %1623 = vmatpush1.bf16.msra.mxu0 0
    %1624 = vmatprep.subr.bf16.mxu0 0
    %1625 = vmatpush1.bf16.msra.mxu0 0
    %1626 = vmatprep.subr.bf16.mxu0 0
    %1627 = vmatpush1.bf16.msra.mxu0 0
    %1628 = vmatprep.subr.bf16.mxu0 0
    %1629 = vmatpush1.bf16.msra.mxu0 0
    %1630 = vmatprep.subr.bf16.mxu0 0
    %1631 = vmatpush1.bf16.msra.mxu0 0
    %1632 = vmatprep.mubr.bf16.mxu0 0
    %1633 = vmatmul.mubr.bf16.gmra.mrb[0].mxu0 %v1528
    %v1634 = vpop.f32.mrb[0].mxu0
    %v1635 = vadd.f32 %v1550, %v1634
    %v1636 = vpop.f32.mrb[0].mxu0
    %v1637 = vpop.f32.mrb[0].mxu0
    %v1638 = vpop.f32.mrb[0].mxu0
    %1639 = vdwg.mxu0
    %1640 = vst [vmem:[#allocation11] sm:$0xff] %v1635
    // Predicated region
    $region42: #{tpu_custom_call.1} parent=1 // pred_check
      _
    $region43: #{tpu_custom_call.1} parent=1 // pred_check_branch
      %1642 = sbr.rel (0) target = $region45
    $region44: #{tpu_custom_call.1} parent=1 // pred_region
      %s1644 = ssub.s32 128, 128
      %1645 = vsyncadd [#allocation5], %s1644
      %s1647 = sshll.u32 [#allocation11], 4
      %s1648 = int_to_ptr.vmem [resolvable:$true] %s1647
      %1650 = dma.vmem_to_hbm [thread:$0]  %s1648, 128, %s6, [#allocation5]
    $region45: #{tpu_custom_call.1} parent=1 // pred_fallthru
      _
    // Predicated region
    $region46: #{tpu_custom_call.1} parent=1 // pred_check
      _
    $region47: #{tpu_custom_call.1} parent=1 // pred_check_branch
      %1652 = sbr.rel (0) target = $region49
    $region48: #{tpu_custom_call.1} parent=1 // pred_region
      %1653 = dma.done [#allocation5], 128
    $region49: #{tpu_custom_call.1} parent=1 // pred_fallthru
      _
    %1654 = vsyncpa [#allocation4], 1
    %1655 = vsyncpa [#allocation7], 1
    %1656 = vsyncpa [#allocation10], 1
    %1657 = vsyncpa [#allocation5], 1

</llo_original>
